<compile_context>
chip_gen: v7x
topology: tpu7x:2x2x1
jax: 0.10.0
libtpu: 0.0.40
codegen_flags: <defaults>
</compile_context>

<pallas_src>
import functools
from math import sqrt

import jax
import jax.numpy as jnp
from jax.experimental import pallas as pl
from jax.experimental.pallas import tpu as pltpu


def _mhsa_kernel(x_ref, wq_ref, wk_ref, wv_ref, o_ref, *,
                 batch_block, num_heads, dk, dv):
    """One batch block: fused projections + head-batched attention.

    x_ref : (bb, n, dim_in)   VMEM  (bf16 by default)
    wq_ref: (dim_in, dim_k)   VMEM  (pre-transposed; 1/sqrt(dk) folded in)
    wk_ref: (dim_in, dim_k)   VMEM  (pre-transposed)
    wv_ref: (dim_in, dim_v)   VMEM  (pre-transposed)
    o_ref : (bb, n, dim_v)    VMEM  (lane-dense: heads side by side)
    """
    bb = batch_block
    n = x_ref.shape[1]
    dim_in = x_ref.shape[2]
    cdt = x_ref.dtype  # compute (MXU operand) dtype, typically bf16

    # Flatten the batch block into rows: one dense MXU matmul per projection
    # with a 2x larger M dim (leading-dim merge only; trailing dims untouched).
    x = x_ref[...].reshape(bb * n, dim_in)

    q = jnp.dot(x, wq_ref[...], preferred_element_type=jnp.float32).astype(cdt)
    k = jnp.dot(x, wk_ref[...], preferred_element_type=jnp.float32).astype(cdt)
    v = jnp.dot(x, wv_ref[...], preferred_element_type=jnp.float32).astype(cdt)

    # Gather per-(batch, head) tiles into one (bb*H, n, d) stack per tensor.
    # Static sublane/lane slices + a major-axis stack; done ONCE so all the
    # MXU / softmax / EUP work below runs as a single batched pass.
    def gather_heads(t, d):
        parts = []
        for b in range(bb):
            rows = t[b * n:(b + 1) * n, :]                       # (n, H*d)
            for h in range(num_heads):
                parts.append(rows[:, h * d:(h + 1) * d])         # (n, d)
        return jnp.stack(parts, axis=0)                          # (bb*H, n, d)

    qh = gather_heads(q, dk)                                     # (bb*H, n, dk)
    kh = gather_heads(k, dk)                                     # (bb*H, n, dk)
    vh = gather_heads(v, dv)                                     # (bb*H, n, dv)

    # One batched score matmul for all (batch, head) pairs; contraction on the
    # last dim of both operands (no explicit transpose).  Scale already folded
    # into W_q; f32 accumulation.
    s = jnp.einsum('bqd,bkd->bqk', qh, kh,
                   preferred_element_type=jnp.float32)           # (bb*H, n, n) f32

    # Single numerically-stable softmax pass over the whole block.  The
    # normalization is deferred until AFTER the PV matmul (O(n*dv) vs O(n^2)).
    s_max = jnp.max(s, axis=-1, keepdims=True)
    p = jnp.exp(s - s_max)                                       # unnormalized
    denom = jnp.sum(p, axis=-1, keepdims=True)                   # (bb*H, n, 1) f32

    o = jnp.einsum('bqk,bkd->bqd', p.astype(cdt), vh,
                   preferred_element_type=jnp.float32)           # (bb*H, n, dv) f32
    o = o * pl.reciprocal(denom, approx=True)                    # EUP slot

    # Lane-dense store: heads side by side -> (n, H*dv), one full-width store
    # per batch row.
    for b in range(bb):
        heads = [o[b * num_heads + h] for h in range(num_heads)]
        o_ref[b] = jnp.concatenate(heads, axis=-1).astype(o_ref.dtype)


def multi_head_self_attention(x, w_q, w_k, w_v, num_heads, *,
                              compute_dtype=jnp.bfloat16, batch_block=None):
    """x: (batch, n, dim_in); w_*: (dim_out, dim_in) as in nn.Linear.weight."""
    batch, n, dim_in = x.shape
    dim_k = w_q.shape[0]
    dim_v = w_v.shape[0]
    assert dim_k % num_heads == 0 and dim_v % num_heads == 0
    dk = dim_k // num_heads
    dv = dim_v // num_heads
    scale = 1.0 / sqrt(dk)

    if batch_block is None:
        # Two grid steps when batch is even: balances the two v7x TensorCores
        # (parallel axis) while keeping the serial per-step overhead on
        # single-TC v5e/v6e at just 2 steps.
        batch_block = batch // 2 if (batch % 2 == 0 and batch >= 2) else 1
    assert batch % batch_block == 0
    num_blocks = batch // batch_block

    # Glue (free): pre-transpose weights so the kernel does a plain x @ W.
    # Fold 1/sqrt(dk) into W_q BEFORE the bf16 cast so the scaled weights are
    # what get rounded.
    wq_t = (w_q * scale).T.astype(compute_dtype)   # (dim_in, dim_k)
    wk_t = w_k.T.astype(compute_dtype)             # (dim_in, dim_k)
    wv_t = w_v.T.astype(compute_dtype)             # (dim_in, dim_v)
    x_c = x.astype(compute_dtype)

    kernel = functools.partial(_mhsa_kernel, batch_block=batch_block,
                               num_heads=num_heads, dk=dk, dv=dv)

    return pl.pallas_call(
        kernel,
        out_shape=jax.ShapeDtypeStruct((batch, n, dim_v), x.dtype),
        grid=(num_blocks,),
        in_specs=[
            pl.BlockSpec((batch_block, n, dim_in), lambda b: (b, 0, 0)),  # x block
            pl.BlockSpec((dim_in, dim_k), lambda b: (0, 0)),  # W_q^T (scaled), grid-invariant
            pl.BlockSpec((dim_in, dim_k), lambda b: (0, 0)),  # W_k^T, grid-invariant
            pl.BlockSpec((dim_in, dim_v), lambda b: (0, 0)),  # W_v^T, grid-invariant
        ],
        out_specs=pl.BlockSpec((batch_block, n, dim_v), lambda b: (b, 0, 0)),
        compiler_params=pltpu.CompilerParams(
            dimension_semantics=("parallel",)),
    )(x_c, wq_t, wk_t, wv_t)


def _reference(x, w_q, w_k, w_v, num_heads):
    """Pure-JAX f32 reference mirroring the PyTorch forward."""
    batch, n, dim_in = x.shape
    dim_k = w_q.shape[0]
    dim_v = w_v.shape[0]
    dk = dim_k // num_heads
    dv = dim_v // num_heads
    q = (x @ w_q.T).reshape(batch, n, num_heads, dk).transpose(0, 2, 1, 3)
    k = (x @ w_k.T).reshape(batch, n, num_heads, dk).transpose(0, 2, 1, 3)
    v = (x @ w_v.T).reshape(batch, n, num_heads, dv).transpose(0, 2, 1, 3)
    dist = jnp.einsum("bhqd,bhkd->bhqk", q, k) * (1.0 / sqrt(dk))
    dist = jax.nn.softmax(dist, axis=-1)
    att = jnp.einsum("bhqk,bhkd->bhqd", dist, v)
    return att.transpose(0, 2, 1, 3).reshape(batch, n, dim_v)


if __name__ == "__main__":
    # Small shapes consistent with the module's forward.
    batch, n, dim_in = 2, 16, 32
    dim_k, dim_v, num_heads = 32, 32, 8

    key = jax.random.PRNGKey(0)
    kx, kq, kk, kv = jax.random.split(key, 4)
    x = jax.random.normal(kx, (batch, n, dim_in), dtype=jnp.float32)
    # Deterministic synthetic weights (nn.Linear weight shape: (out, in)).
    w_q = jax.random.normal(kq, (dim_k, dim_in), dtype=jnp.float32) * 0.1
    w_k = jax.random.normal(kk, (dim_k, dim_in), dtype=jnp.float32) * 0.1
    w_v = jax.random.normal(kv, (dim_v, dim_in), dtype=jnp.float32) * 0.1

    out = multi_head_self_attention(x, w_q, w_k, w_v, num_heads)
    out = jax.block_until_ready(out)

    ref = _reference(x, w_q, w_k, w_v, num_heads)
    assert out.shape == (batch, n, dim_v)
    # Tolerance covers bf16 MXU operands (f32 accumulation) + approx EUP
    # reciprocal; observed error is ~1e-3-1e-2 relative at these shapes.
    max_err = jnp.max(jnp.abs(out.astype(jnp.float32) - ref))
    assert jnp.allclose(out, ref, atol=2e-2, rtol=2e-2), f"max abs err {max_err}"

    print("KERNEL_OK")
</pallas_src>

<mosaic_0001>
module attributes {stable_mosaic.version = 11 : i64} {
  func.func @_mhsa_kernel(%arg0: i32, %arg1: memref<1x16x32xbf16, #tpu.memory_space<vmem>>, %arg2: memref<32x32xbf16, #tpu.memory_space<vmem>>, %arg3: memref<32x32xbf16, #tpu.memory_space<vmem>>, %arg4: memref<32x32xbf16, #tpu.memory_space<vmem>>, %arg5: memref<1x16x32xf32, #tpu.memory_space<vmem>>) attributes {dimension_semantics = [#tpu.dimension_semantics<parallel>], iteration_bounds = array<i64: 2>, scalar_prefetch = 0 : i64, scratch_operands = 0 : i64, tpu.core_type = #tpu.core_type<tc>, window_params = [{transform_indices = @transform_0, window_bounds = array<i64: 1, 16, 32>}, {pipeline_mode = #tpu.pipeline_mode<synchronous>, transform_indices = @transform_1, window_bounds = array<i64: 32, 32>}, {pipeline_mode = #tpu.pipeline_mode<synchronous>, transform_indices = @transform_2, window_bounds = array<i64: 32, 32>}, {pipeline_mode = #tpu.pipeline_mode<synchronous>, transform_indices = @transform_3, window_bounds = array<i64: 32, 32>}, {transform_indices = @transform_4, window_bounds = array<i64: 1, 16, 32>}]} {
    %c0 = arith.constant 0 : index
    %c0_0 = arith.constant 0 : index
    %c0_1 = arith.constant 0 : index
    %0 = vector.load %arg1[%c0, %c0_0, %c0_1] : memref<1x16x32xbf16, #tpu.memory_space<vmem>>, vector<1x16x32xbf16>
    %1 = vector.shape_cast %0 : vector<1x16x32xbf16> to vector<16x32xbf16>
    %c0_2 = arith.constant 0 : index
    %c0_3 = arith.constant 0 : index
    %2 = vector.load %arg2[%c0_2, %c0_3] : memref<32x32xbf16, #tpu.memory_space<vmem>>, vector<32x32xbf16>
    %cst = arith.constant dense<0.000000e+00> : vector<16x32xf32>
    %3 = tpu.matmul %1, %2, %cst {dimension_numbers = #tpu.dot_dimension_numbers<[1], [0], [0], [1], [0, 0, 1, 1], [], []>} : vector<16x32xbf16>, vector<32x32xbf16>, vector<16x32xf32> -> vector<16x32xf32>
    %4 = arith.truncf %3 : vector<16x32xf32> to vector<16x32xbf16>
    %c0_4 = arith.constant 0 : index
    %c0_5 = arith.constant 0 : index
    %5 = vector.load %arg3[%c0_4, %c0_5] : memref<32x32xbf16, #tpu.memory_space<vmem>>, vector<32x32xbf16>
    %cst_6 = arith.constant dense<0.000000e+00> : vector<16x32xf32>
    %6 = tpu.matmul %1, %5, %cst_6 {dimension_numbers = #tpu.dot_dimension_numbers<[1], [0], [0], [1], [0, 0, 1, 1], [], []>} : vector<16x32xbf16>, vector<32x32xbf16>, vector<16x32xf32> -> vector<16x32xf32>
    %7 = arith.truncf %6 : vector<16x32xf32> to vector<16x32xbf16>
    %c0_7 = arith.constant 0 : index
    %c0_8 = arith.constant 0 : index
    %8 = vector.load %arg4[%c0_7, %c0_8] : memref<32x32xbf16, #tpu.memory_space<vmem>>, vector<32x32xbf16>
    %cst_9 = arith.constant dense<0.000000e+00> : vector<16x32xf32>
    %9 = tpu.matmul %1, %8, %cst_9 {dimension_numbers = #tpu.dot_dimension_numbers<[1], [0], [0], [1], [0, 0, 1, 1], [], []>} : vector<16x32xbf16>, vector<32x32xbf16>, vector<16x32xf32> -> vector<16x32xf32>
    %10 = arith.truncf %9 : vector<16x32xf32> to vector<16x32xbf16>
    %11 = vector.extract_strided_slice %4 {offsets = [0, 0], sizes = [16, 4], strides = [1, 1]} : vector<16x32xbf16> to vector<16x4xbf16>
    %12 = vector.extract_strided_slice %4 {offsets = [0, 4], sizes = [16, 4], strides = [1, 1]} : vector<16x32xbf16> to vector<16x4xbf16>
    %13 = vector.extract_strided_slice %4 {offsets = [0, 8], sizes = [16, 4], strides = [1, 1]} : vector<16x32xbf16> to vector<16x4xbf16>
    %14 = vector.extract_strided_slice %4 {offsets = [0, 12], sizes = [16, 4], strides = [1, 1]} : vector<16x32xbf16> to vector<16x4xbf16>
    %15 = vector.extract_strided_slice %4 {offsets = [0, 16], sizes = [16, 4], strides = [1, 1]} : vector<16x32xbf16> to vector<16x4xbf16>
    %16 = vector.extract_strided_slice %4 {offsets = [0, 20], sizes = [16, 4], strides = [1, 1]} : vector<16x32xbf16> to vector<16x4xbf16>
    %17 = vector.extract_strided_slice %4 {offsets = [0, 24], sizes = [16, 4], strides = [1, 1]} : vector<16x32xbf16> to vector<16x4xbf16>
    %18 = vector.extract_strided_slice %4 {offsets = [0, 28], sizes = [16, 4], strides = [1, 1]} : vector<16x32xbf16> to vector<16x4xbf16>
    %19 = vector.shape_cast %11 : vector<16x4xbf16> to vector<1x16x4xbf16>
    %20 = vector.shape_cast %12 : vector<16x4xbf16> to vector<1x16x4xbf16>
    %21 = vector.shape_cast %13 : vector<16x4xbf16> to vector<1x16x4xbf16>
    %22 = vector.shape_cast %14 : vector<16x4xbf16> to vector<1x16x4xbf16>
    %23 = vector.shape_cast %15 : vector<16x4xbf16> to vector<1x16x4xbf16>
    %24 = vector.shape_cast %16 : vector<16x4xbf16> to vector<1x16x4xbf16>
    %25 = vector.shape_cast %17 : vector<16x4xbf16> to vector<1x16x4xbf16>
    %26 = vector.shape_cast %18 : vector<16x4xbf16> to vector<1x16x4xbf16>
    %27 = tpu.concatenate %19, %20, %21, %22, %23, %24, %25, %26 in 0 : vector<1x16x4xbf16>, vector<1x16x4xbf16>, vector<1x16x4xbf16>, vector<1x16x4xbf16>, vector<1x16x4xbf16>, vector<1x16x4xbf16>, vector<1x16x4xbf16>, vector<1x16x4xbf16> -> vector<8x16x4xbf16>
    %28 = vector.extract_strided_slice %7 {offsets = [0, 0], sizes = [16, 4], strides = [1, 1]} : vector<16x32xbf16> to vector<16x4xbf16>
    %29 = vector.extract_strided_slice %7 {offsets = [0, 4], sizes = [16, 4], strides = [1, 1]} : vector<16x32xbf16> to vector<16x4xbf16>
    %30 = vector.extract_strided_slice %7 {offsets = [0, 8], sizes = [16, 4], strides = [1, 1]} : vector<16x32xbf16> to vector<16x4xbf16>
    %31 = vector.extract_strided_slice %7 {offsets = [0, 12], sizes = [16, 4], strides = [1, 1]} : vector<16x32xbf16> to vector<16x4xbf16>
    %32 = vector.extract_strided_slice %7 {offsets = [0, 16], sizes = [16, 4], strides = [1, 1]} : vector<16x32xbf16> to vector<16x4xbf16>
    %33 = vector.extract_strided_slice %7 {offsets = [0, 20], sizes = [16, 4], strides = [1, 1]} : vector<16x32xbf16> to vector<16x4xbf16>
    %34 = vector.extract_strided_slice %7 {offsets = [0, 24], sizes = [16, 4], strides = [1, 1]} : vector<16x32xbf16> to vector<16x4xbf16>
    %35 = vector.extract_strided_slice %7 {offsets = [0, 28], sizes = [16, 4], strides = [1, 1]} : vector<16x32xbf16> to vector<16x4xbf16>
    %36 = vector.shape_cast %28 : vector<16x4xbf16> to vector<1x16x4xbf16>
    %37 = vector.shape_cast %29 : vector<16x4xbf16> to vector<1x16x4xbf16>
    %38 = vector.shape_cast %30 : vector<16x4xbf16> to vector<1x16x4xbf16>
    %39 = vector.shape_cast %31 : vector<16x4xbf16> to vector<1x16x4xbf16>
    %40 = vector.shape_cast %32 : vector<16x4xbf16> to vector<1x16x4xbf16>
    %41 = vector.shape_cast %33 : vector<16x4xbf16> to vector<1x16x4xbf16>
    %42 = vector.shape_cast %34 : vector<16x4xbf16> to vector<1x16x4xbf16>
    %43 = vector.shape_cast %35 : vector<16x4xbf16> to vector<1x16x4xbf16>
    %44 = tpu.concatenate %36, %37, %38, %39, %40, %41, %42, %43 in 0 : vector<1x16x4xbf16>, vector<1x16x4xbf16>, vector<1x16x4xbf16>, vector<1x16x4xbf16>, vector<1x16x4xbf16>, vector<1x16x4xbf16>, vector<1x16x4xbf16>, vector<1x16x4xbf16> -> vector<8x16x4xbf16>
    %45 = vector.extract_strided_slice %10 {offsets = [0, 0], sizes = [16, 4], strides = [1, 1]} : vector<16x32xbf16> to vector<16x4xbf16>
    %46 = vector.extract_strided_slice %10 {offsets = [0, 4], sizes = [16, 4], strides = [1, 1]} : vector<16x32xbf16> to vector<16x4xbf16>
    %47 = vector.extract_strided_slice %10 {offsets = [0, 8], sizes = [16, 4], strides = [1, 1]} : vector<16x32xbf16> to vector<16x4xbf16>
    %48 = vector.extract_strided_slice %10 {offsets = [0, 12], sizes = [16, 4], strides = [1, 1]} : vector<16x32xbf16> to vector<16x4xbf16>
    %49 = vector.extract_strided_slice %10 {offsets = [0, 16], sizes = [16, 4], strides = [1, 1]} : vector<16x32xbf16> to vector<16x4xbf16>
    %50 = vector.extract_strided_slice %10 {offsets = [0, 20], sizes = [16, 4], strides = [1, 1]} : vector<16x32xbf16> to vector<16x4xbf16>
    %51 = vector.extract_strided_slice %10 {offsets = [0, 24], sizes = [16, 4], strides = [1, 1]} : vector<16x32xbf16> to vector<16x4xbf16>
    %52 = vector.extract_strided_slice %10 {offsets = [0, 28], sizes = [16, 4], strides = [1, 1]} : vector<16x32xbf16> to vector<16x4xbf16>
    %53 = vector.shape_cast %45 : vector<16x4xbf16> to vector<1x16x4xbf16>
    %54 = vector.shape_cast %46 : vector<16x4xbf16> to vector<1x16x4xbf16>
    %55 = vector.shape_cast %47 : vector<16x4xbf16> to vector<1x16x4xbf16>
    %56 = vector.shape_cast %48 : vector<16x4xbf16> to vector<1x16x4xbf16>
    %57 = vector.shape_cast %49 : vector<16x4xbf16> to vector<1x16x4xbf16>
    %58 = vector.shape_cast %50 : vector<16x4xbf16> to vector<1x16x4xbf16>
    %59 = vector.shape_cast %51 : vector<16x4xbf16> to vector<1x16x4xbf16>
    %60 = vector.shape_cast %52 : vector<16x4xbf16> to vector<1x16x4xbf16>
    %61 = tpu.concatenate %53, %54, %55, %56, %57, %58, %59, %60 in 0 : vector<1x16x4xbf16>, vector<1x16x4xbf16>, vector<1x16x4xbf16>, vector<1x16x4xbf16>, vector<1x16x4xbf16>, vector<1x16x4xbf16>, vector<1x16x4xbf16>, vector<1x16x4xbf16> -> vector<8x16x4xbf16>
    "tpu.trace_start"() <{level = 10 : i32, message = "bqd,bkd->bqk"}> : () -> ()
    %cst_10 = arith.constant dense<0.000000e+00> : vector<8x16x16xf32>
    %62 = tpu.matmul %27, %44, %cst_10 {dimension_numbers = #tpu.dot_dimension_numbers<[2], [2], [1], [1], [0, 0, 0, 1, 1, 1], [0], [0]>} : vector<8x16x4xbf16>, vector<8x16x4xbf16>, vector<8x16x16xf32> -> vector<8x16x16xf32>
    "tpu.trace_stop"() : () -> ()
    %cst_11 = arith.constant dense<0xFF800000> : vector<8x16xf32>
    %63 = vector.multi_reduction <maximumf>, %62, %cst_11 [2] : vector<8x16x16xf32> to vector<8x16xf32>
    %64 = vector.shape_cast %63 : vector<8x16xf32> to vector<8x16x1xf32>
    %65 = vector.broadcast %64 : vector<8x16x1xf32> to vector<8x16x16xf32>
    %66 = arith.subf %62, %65 : vector<8x16x16xf32>
    %67 = math.exp %66 : vector<8x16x16xf32>
    %cst_12 = arith.constant dense<0.000000e+00> : vector<8x16xf32>
    %68 = vector.multi_reduction <add>, %67, %cst_12 [2] : vector<8x16x16xf32> to vector<8x16xf32>
    %69 = vector.shape_cast %68 : vector<8x16xf32> to vector<8x16x1xf32>
    %70 = arith.truncf %67 : vector<8x16x16xf32> to vector<8x16x16xbf16>
    "tpu.trace_start"() <{level = 10 : i32, message = "bqk,bkd->bqd"}> : () -> ()
    %cst_13 = arith.constant dense<0.000000e+00> : vector<8x16x4xf32>
    %71 = tpu.matmul %70, %61, %cst_13 {dimension_numbers = #tpu.dot_dimension_numbers<[2], [1], [1], [2], [0, 0, 0, 1, 1, 2], [0], [0]>} : vector<8x16x16xbf16>, vector<8x16x4xbf16>, vector<8x16x4xf32> -> vector<8x16x4xf32>
    "tpu.trace_stop"() : () -> ()
    %72 = tpu.reciprocal %69 {approx = true} : vector<8x16x1xf32> -> vector<8x16x1xf32>
    %73 = vector.broadcast %72 : vector<8x16x1xf32> to vector<8x16x4xf32>
    %74 = arith.mulf %71, %73 : vector<8x16x4xf32>
    %75 = vector.extract_strided_slice %74 {offsets = [0, 0, 0], sizes = [1, 16, 4], strides = [1, 1, 1]} : vector<8x16x4xf32> to vector<1x16x4xf32>
    %76 = vector.shape_cast %75 : vector<1x16x4xf32> to vector<16x4xf32>
    %77 = vector.extract_strided_slice %74 {offsets = [1, 0, 0], sizes = [1, 16, 4], strides = [1, 1, 1]} : vector<8x16x4xf32> to vector<1x16x4xf32>
    %78 = vector.shape_cast %77 : vector<1x16x4xf32> to vector<16x4xf32>
    %79 = vector.extract_strided_slice %74 {offsets = [2, 0, 0], sizes = [1, 16, 4], strides = [1, 1, 1]} : vector<8x16x4xf32> to vector<1x16x4xf32>
    %80 = vector.shape_cast %79 : vector<1x16x4xf32> to vector<16x4xf32>
    %81 = vector.extract_strided_slice %74 {offsets = [3, 0, 0], sizes = [1, 16, 4], strides = [1, 1, 1]} : vector<8x16x4xf32> to vector<1x16x4xf32>
    %82 = vector.shape_cast %81 : vector<1x16x4xf32> to vector<16x4xf32>
    %83 = vector.extract_strided_slice %74 {offsets = [4, 0, 0], sizes = [1, 16, 4], strides = [1, 1, 1]} : vector<8x16x4xf32> to vector<1x16x4xf32>
    %84 = vector.shape_cast %83 : vector<1x16x4xf32> to vector<16x4xf32>
    %85 = vector.extract_strided_slice %74 {offsets = [5, 0, 0], sizes = [1, 16, 4], strides = [1, 1, 1]} : vector<8x16x4xf32> to vector<1x16x4xf32>
    %86 = vector.shape_cast %85 : vector<1x16x4xf32> to vector<16x4xf32>
    %87 = vector.extract_strided_slice %74 {offsets = [6, 0, 0], sizes = [1, 16, 4], strides = [1, 1, 1]} : vector<8x16x4xf32> to vector<1x16x4xf32>
    %88 = vector.shape_cast %87 : vector<1x16x4xf32> to vector<16x4xf32>
    %89 = vector.extract_strided_slice %74 {offsets = [7, 0, 0], sizes = [1, 16, 4], strides = [1, 1, 1]} : vector<8x16x4xf32> to vector<1x16x4xf32>
    %90 = vector.shape_cast %89 : vector<1x16x4xf32> to vector<16x4xf32>
    %91 = tpu.concatenate %76, %78, %80, %82, %84, %86, %88, %90 in 1 : vector<16x4xf32>, vector<16x4xf32>, vector<16x4xf32>, vector<16x4xf32>, vector<16x4xf32>, vector<16x4xf32>, vector<16x4xf32>, vector<16x4xf32> -> vector<16x32xf32>
    %c0_14 = arith.constant 0 : index
    %c0_15 = arith.constant 0 : index
    %c0_16 = arith.constant 0 : index
    %92 = vector.load %arg5[%c0_14, %c0_15, %c0_16] : memref<1x16x32xf32, #tpu.memory_space<vmem>>, vector<1x16x32xf32>
    %93 = vector.shape_cast %92 : vector<1x16x32xf32> to vector<16x32xf32>
    %94 = vector.shape_cast %91 : vector<16x32xf32> to vector<1x16x32xf32>
    tpu.vector_store %arg5[%c0_14, %c0_15, %c0_16], %94 {strides = array<i32>} : memref<1x16x32xf32, #tpu.memory_space<vmem>>, vector<1x16x32xf32>,
    return
  }
  func.func @transform_0(%arg0: i32) -> (i32, i32, i32) {
    %c0_i32 = arith.constant 0 : i32
    %c0_i32_0 = arith.constant 0 : i32
    %c0_i32_1 = arith.constant 0 : i32
    return %arg0, %c0_i32, %c0_i32_0 : i32, i32, i32
  }
  func.func @transform_1(%arg0: i32) -> (i32, i32) {
    %c0_i32 = arith.constant 0 : i32
    %c0_i32_0 = arith.constant 0 : i32
    %c0_i32_1 = arith.constant 0 : i32
    return %c0_i32, %c0_i32_0 : i32, i32
  }
  func.func @transform_2(%arg0: i32) -> (i32, i32) {
    %c0_i32 = arith.constant 0 : i32
    %c0_i32_0 = arith.constant 0 : i32
    %c0_i32_1 = arith.constant 0 : i32
    return %c0_i32, %c0_i32_0 : i32, i32
  }
  func.func @transform_3(%arg0: i32) -> (i32, i32) {
    %c0_i32 = arith.constant 0 : i32
    %c0_i32_0 = arith.constant 0 : i32
    %c0_i32_1 = arith.constant 0 : i32
    return %c0_i32, %c0_i32_0 : i32, i32
  }
  func.func @transform_4(%arg0: i32) -> (i32, i32, i32) {
    %c0_i32 = arith.constant 0 : i32
    %c0_i32_0 = arith.constant 0 : i32
    %c0_i32_1 = arith.constant 0 : i32
    return %arg0, %c0_i32, %c0_i32_0 : i32, i32, i32
  }
}

</mosaic_0001>

<llo_original>
// kernel: tpu_custom_call.1
$region0: #{tpu_custom_call.1}
  #allocation0 [shape = 'u32[]', space=smem, size = 0x4, offset = 0x4, fixed_abs, tag = 'smem constant byte address 0x4 - core index']
  #allocation1 [shape = 'u32[144,128]{1,0:T(1,128)}', space=vmem, size = 0x12000, scoped, tag = 'internal scratch']
  %s0 = inlined_call_operand.hbm [shape: bf16[2,16,32], index: 0, kind: input, shape index: {}]
  %s1 = inlined_call_operand.hbm [shape: bf16[32,32], index: 1, kind: input, shape index: {}]
  %s2 = inlined_call_operand.hbm [shape: bf16[32,32], index: 2, kind: input, shape index: {}]
  %s3 = inlined_call_operand.hbm [shape: bf16[32,32], index: 3, kind: input, shape index: {}]
  %s4 = inlined_call_operand.hbm [shape: f32[2,16,32], index: 4, kind: output, shape index: {}]
  %s5 = sld [smem:[#allocation0]]
  $region65: #{tpu_custom_call.1} parent=0
    _
  %s7 = ssub.s32 1, %s5
  %s8 = scalar_select 0, %s7, %s5
  $region1: #{tpu_custom_call.1} parent=0
    #allocation2 [shape = 'u8[8192]{0}', space=vmem, size = 0x2000, scoped, tag = 'input window, operand 0']
    #allocation3 [shape = 's32[2]{0}', space=sflag, size = 0x8, scoped, tag = 'scoped memory for tpu_custom_call.1']
    #allocation4 [shape = 's32[2]{0}', space=sflag, size = 0x8, scoped, tag = 'scoped memory for tpu_custom_call.1']
    #allocation5 [shape = 'u8[8192]{0}', space=vmem, size = 0x2000, scoped, tag = 'input window, operand 1, single buffered']
    #allocation6 [shape = 's32[1]{0}', space=sflag, size = 0x4, scoped, tag = 'scoped memory for tpu_custom_call.1']
    #allocation7 [shape = 'u8[8192]{0}', space=vmem, size = 0x2000, scoped, tag = 'input window, operand 2, single buffered']
    #allocation8 [shape = 'u8[8192]{0}', space=vmem, size = 0x2000, scoped, tag = 'input window, operand 3, single buffered']
    #allocation9 [shape = 's32[1]{0}', space=sflag, size = 0x4, scoped, tag = 'scoped memory for tpu_custom_call.1']
    #allocation10 [shape = 'u8[16384]{0}', space=vmem, size = 0x4000, scoped, tag = 'output window, operand 0']
    %9 = vsyncpa [#allocation3], 0
    %s10 = scalar_lea.sflag [#allocation3], 1
    %11 = vsyncpa %s10, 0
    %12 = vsyncpa [#allocation6], 0
    %13 = vsyncpa [#allocation9], 0
    %14 = vsyncpa [#allocation4], 0
    %s15 = scalar_lea.sflag [#allocation4], 1
    %16 = vsyncpa %s15, 0
    loop: start=0, step=1, limit=4
    $region2: #{tpu_custom_call.1} parent=1 // loop_pre_header
      _
    $region3: #{tpu_custom_call.1} parent=1 // loop_header
      %s18 = sphi 0, %s22
      %p19 = scmp.ge.s32.totalorder %s18, 4
      %s28 = sphi 0, %s30
      %s31 = sphi 0, %s28
      %s32 = sphi 0, %s31
      %s48 = sphi 0, %s32
      %s52 = sphi 0, %s52
      %s54 = sphi 0, %s52
      %s55 = sphi 0, %s54
      %s69 = sphi 0, %s55
      %s73 = sphi 0, %s73
      %s75 = sphi 0, %s73
      %s76 = sphi 0, %s75
      %s90 = sphi 0, %s76
      %s94 = sphi 0, %s94
      %s96 = sphi 0, %s94
      %s97 = sphi 0, %s96
      %s111 = sphi 0, %s97
      %s117 = sphi 0, %s119
      %s120 = sphi 0, %s117
      %s121 = sphi 0, %s120
      %s137 = sphi 0, %s121
    $region4: #{tpu_custom_call.1} parent=1 // loop_header_branch
      %21 = sbr.rel (%p19) target = $region8
    $region5: #{tpu_custom_call.1} parent=1 // loop_body
      %s23 = ssub.s32 %s18, 1
      %s24 = ssub.s32 %s18, 2
      %s25 = sadd.s32 %s18, 1
      %s26 = ssub.s32 %s18, %s25
      %p27 = scmp.eq.s32.totalorder %s26, 0
      %s29 = sadd.s32 %s28, 1
      %s30 = scalar_select %p27, %s28, %s29
      %p33 = pneg %p27
      %p34 = scmp.eq.s32.totalorder %s18, 1
      %p35 = por %p33, %p34
      %p36 = scmp.ne.s32.totalorder %s28, %s31
      %p37 = scmp.eq.s32.totalorder %s18, 0
      %p38 = por %p36, %p37
      %p39 = scmp.ne.s32.totalorder %s28, %s31
      %p40 = scmp.eq.s32.totalorder %s23, 1
      %p41 = por %p39, %p40
      %p42 = scmp.ne.s32.totalorder %s31, %s32
      %p43 = scmp.eq.s32.totalorder %s23, 0
      %p44 = por %p42, %p43
      %p45 = scmp.ne.s32.totalorder %s31, %s32
      %p46 = scmp.eq.s32.totalorder %s24, 1
      %p47 = por %p45, %p46
      %p49 = scmp.ne.s32.totalorder %s32, %s48
      %p50 = scmp.eq.s32.totalorder %s24, 0
      %p51 = por %p49, %p50
      %s53 = sadd.s32 %s52, 1
      %p56 = scmp.eq.s32.totalorder %s18, 1
      %p57 = scmp.ne.s32.totalorder %s52, %s54
      %p58 = scmp.eq.s32.totalorder %s18, 0
      %p59 = por %p57, %p58
      %p60 = scmp.ne.s32.totalorder %s52, %s54
      %p61 = scmp.eq.s32.totalorder %s23, 1
      %p62 = por %p60, %p61
      %p63 = scmp.ne.s32.totalorder %s54, %s55
      %p64 = scmp.eq.s32.totalorder %s23, 0
      %p65 = por %p63, %p64
      %p66 = scmp.ne.s32.totalorder %s54, %s55
      %p67 = scmp.eq.s32.totalorder %s24, 1
      %p68 = por %p66, %p67
      %p70 = scmp.ne.s32.totalorder %s55, %s69
      %p71 = scmp.eq.s32.totalorder %s24, 0
      %p72 = por %p70, %p71
      %s74 = sadd.s32 %s73, 1
      %p77 = scmp.eq.s32.totalorder %s18, 1
      %p78 = scmp.ne.s32.totalorder %s73, %s75
      %p79 = scmp.eq.s32.totalorder %s18, 0
      %p80 = por %p78, %p79
      %p81 = scmp.ne.s32.totalorder %s73, %s75
      %p82 = scmp.eq.s32.totalorder %s23, 1
      %p83 = por %p81, %p82
      %p84 = scmp.ne.s32.totalorder %s75, %s76
      %p85 = scmp.eq.s32.totalorder %s23, 0
      %p86 = por %p84, %p85
      %p87 = scmp.ne.s32.totalorder %s75, %s76
      %p88 = scmp.eq.s32.totalorder %s24, 1
      %p89 = por %p87, %p88
      %p91 = scmp.ne.s32.totalorder %s76, %s90
      %p92 = scmp.eq.s32.totalorder %s24, 0
      %p93 = por %p91, %p92
      %s95 = sadd.s32 %s94, 1
      %p98 = scmp.eq.s32.totalorder %s18, 1
      %p99 = scmp.ne.s32.totalorder %s94, %s96
      %p100 = scmp.eq.s32.totalorder %s18, 0
      %p101 = por %p99, %p100
      %p102 = scmp.ne.s32.totalorder %s94, %s96
      %p103 = scmp.eq.s32.totalorder %s23, 1
      %p104 = por %p102, %p103
      %p105 = scmp.ne.s32.totalorder %s96, %s97
      %p106 = scmp.eq.s32.totalorder %s23, 0
      %p107 = por %p105, %p106
      %p108 = scmp.ne.s32.totalorder %s96, %s97
      %p109 = scmp.eq.s32.totalorder %s24, 1
      %p110 = por %p108, %p109
      %p112 = scmp.ne.s32.totalorder %s97, %s111
      %p113 = scmp.eq.s32.totalorder %s24, 0
      %p114 = por %p112, %p113
      %s115 = ssub.s32 %s18, %s25
      %p116 = scmp.eq.s32.totalorder %s115, 0
      %s118 = sadd.s32 %s117, 1
      %s119 = scalar_select %p116, %s117, %s118
      %p122 = pneg %p116
      %p123 = scmp.eq.s32.totalorder %s18, 1
      %p124 = por %p122, %p123
      %p125 = scmp.ne.s32.totalorder %s117, %s120
      %p126 = scmp.eq.s32.totalorder %s18, 0
      %p127 = por %p125, %p126
      %p128 = scmp.ne.s32.totalorder %s117, %s120
      %p129 = scmp.eq.s32.totalorder %s23, 1
      %p130 = por %p128, %p129
      %p131 = scmp.ne.s32.totalorder %s120, %s121
      %p132 = scmp.eq.s32.totalorder %s23, 0
      %p133 = por %p131, %p132
      %p134 = scmp.ne.s32.totalorder %s120, %s121
      %p135 = scmp.eq.s32.totalorder %s24, 1
      %p136 = por %p134, %p135
      %p138 = scmp.ne.s32.totalorder %s121, %s137
      %p139 = scmp.eq.s32.totalorder %s24, 0
      %p140 = por %p138, %p139
      %p141 = scmp.le.s32.totalorder 1, %s18
      %p142 = scmp.lt.s32.totalorder %s18, 3
      %p143 = pnand %p141, %p142
      %p144 = pneg %p143
      // Predicated region
      $region9: #{tpu_custom_call.1} parent=5 // pred_check
        _
      $region10: #{tpu_custom_call.1} parent=5 // pred_check_branch
        %146 = sbr.rel (%p143) target = $region12
      $region11: #{tpu_custom_call.1} parent=5 // pred_region
        %s147 = ssub.s32 %s18, 1
        // Predicated region
        $region13: #{tpu_custom_call.1} parent=11 // pred_check
          %p148 = pneg %p65
        $region14: #{tpu_custom_call.1} parent=11 // pred_check_branch
          %150 = sbr.rel (%p148) target = $region16
        $region15: #{tpu_custom_call.1} parent=11 // pred_region
          %s152 = ssub.s32 256, 256
          %153 = vsyncadd [#allocation6], %s152
          %s154 = sshll.u32 [#allocation5], 4
          %s155 = int_to_ptr.vmem [resolvable:$true] %s154
          %160 = dma.hbm_to_vmem [thread:$0]  %s1, 256, %s155, [#allocation6], 64, 64, 4
        $region16: #{tpu_custom_call.1} parent=11 // pred_fallthru
          _
        // Predicated region
        $region17: #{tpu_custom_call.1} parent=11 // pred_check
          %p161 = pneg %p86
        $region18: #{tpu_custom_call.1} parent=11 // pred_check_branch
          %163 = sbr.rel (%p161) target = $region20
        $region19: #{tpu_custom_call.1} parent=11 // pred_region
          %s165 = ssub.s32 256, 256
          %166 = vsyncadd [#allocation6], %s165
          %s167 = sshll.u32 [#allocation7], 4
          %s168 = int_to_ptr.vmem [resolvable:$true] %s167
          %173 = dma.hbm_to_vmem [thread:$0]  %s2, 256, %s168, [#allocation6], 64, 64, 4
        $region20: #{tpu_custom_call.1} parent=11 // pred_fallthru
          _
        // Predicated region
        $region21: #{tpu_custom_call.1} parent=11 // pred_check
          %p174 = pneg %p107
        $region22: #{tpu_custom_call.1} parent=11 // pred_check_branch
          %176 = sbr.rel (%p174) target = $region24
        $region23: #{tpu_custom_call.1} parent=11 // pred_region
          %s178 = ssub.s32 256, 256
          %179 = vsyncadd [#allocation9], %s178
          %s180 = sshll.u32 [#allocation8], 4
          %s181 = int_to_ptr.vmem [resolvable:$true] %s180
          %186 = dma.hbm_to_vmem [thread:$0]  %s3, 256, %s181, [#allocation9], 64, 64, 4
        $region24: #{tpu_custom_call.1} parent=11 // pred_fallthru
          _
      $region12: #{tpu_custom_call.1} parent=5 // pred_fallthru
        _
      %p187 = scmp.lt.s32.totalorder %s18, 2
      // Predicated region
      $region25: #{tpu_custom_call.1} parent=5 // pred_check
        %p188 = pneg %p187
      $region26: #{tpu_custom_call.1} parent=5 // pred_check_branch
        %190 = sbr.rel (%p188) target = $region28
      $region27: #{tpu_custom_call.1} parent=5 // pred_region
        // Predicated region
        $region29: #{tpu_custom_call.1} parent=27 // pred_check
          %p191 = pneg %p38
        $region30: #{tpu_custom_call.1} parent=27 // pred_check_branch
          %193 = sbr.rel (%p191) target = $region32
        $region31: #{tpu_custom_call.1} parent=27 // pred_region
          %s194 = sand.u32 %s28, 1
          %s195 = scalar_lea.sflag [#allocation3], %s194
          %s196 = sand.u32 %s28, 1
          %s197 = smul.addr %s196, 8
          %s198 = scalar_lea.vmem [#allocation2], %s197
          %s200 = ssub.s32 128, 128
          %201 = vsyncadd %s195, %s200
          %s202 = smul.addr %s18, 2
          %s203 = smul.addr %s202, 64
          %s204 = scalar_lea.hbm %s0, %s203
          %s205 = sshll.u32 %s198, 4
          %s206 = int_to_ptr.vmem [resolvable:$true] %s205
          %211 = dma.hbm_to_vmem [thread:$0]  %s204, 128, %s206, %s195, 64, 64, 4
        $region32: #{tpu_custom_call.1} parent=27 // pred_fallthru
          _
      $region28: #{tpu_custom_call.1} parent=5 // pred_fallthru
        _
      %p212 = scmp.le.s32.totalorder 1, %s18
      %p213 = scmp.lt.s32.totalorder %s18, 3
      %p214 = pnand %p212, %p213
      %p215 = pneg %p214
      // Predicated region
      $region33: #{tpu_custom_call.1} parent=5 // pred_check
        _
      $region34: #{tpu_custom_call.1} parent=5 // pred_check_branch
        %217 = sbr.rel (%p214) target = $region36
      $region35: #{tpu_custom_call.1} parent=5 // pred_region
        %s218 = ssub.s32 %s18, 1
        %s219 = sand.u32 %s31, 1
        %s220 = scalar_lea.sflag [#allocation3], %s219
        %s221 = sand.u32 %s31, 1
        %s222 = smul.addr %s221, 8
        %s223 = scalar_lea.vmem [#allocation2], %s222
        // Predicated region
        $region37: #{tpu_custom_call.1} parent=35 // pred_check
          %p224 = pneg %p44
        $region38: #{tpu_custom_call.1} parent=35 // pred_check_branch
          %226 = sbr.rel (%p224) target = $region40
        $region39: #{tpu_custom_call.1} parent=35 // pred_region
          %227 = dma.done %s220, 128
        $region40: #{tpu_custom_call.1} parent=35 // pred_fallthru
          _
        // Predicated region
        $region41: #{tpu_custom_call.1} parent=35 // pred_check
          %p228 = pneg %p65
        $region42: #{tpu_custom_call.1} parent=35 // pred_check_branch
          %230 = sbr.rel (%p228) target = $region44
        $region43: #{tpu_custom_call.1} parent=35 // pred_region
          %231 = dma.done [#allocation6], 256
        $region44: #{tpu_custom_call.1} parent=35 // pred_fallthru
          _
        // Predicated region
        $region45: #{tpu_custom_call.1} parent=35 // pred_check
          %p232 = pneg %p86
        $region46: #{tpu_custom_call.1} parent=35 // pred_check_branch
          %234 = sbr.rel (%p232) target = $region48
        $region47: #{tpu_custom_call.1} parent=35 // pred_region
          %235 = dma.done [#allocation6], 256
        $region48: #{tpu_custom_call.1} parent=35 // pred_fallthru
          _
        // Predicated region
        $region49: #{tpu_custom_call.1} parent=35 // pred_check
          %p236 = pneg %p107
        $region50: #{tpu_custom_call.1} parent=35 // pred_check_branch
          %238 = sbr.rel (%p236) target = $region52
        $region51: #{tpu_custom_call.1} parent=35 // pred_region
          %239 = dma.done [#allocation9], 256
        $region52: #{tpu_custom_call.1} parent=35 // pred_fallthru
          _
        %s240 = sand.u32 %s31, 1
        %s241 = scalar_lea.sflag [#allocation3], %s240
        %s242 = sand.u32 %s31, 1
        %s243 = smul.addr %s242, 8
        %s244 = scalar_lea.vmem [#allocation2], %s243
        %p245 = pneg %p44
        %p246 = pneg %p41
        %p247 = pneg %p65
        %p248 = pneg %p62
        %p249 = pneg %p86
        %p250 = pneg %p83
        %p251 = pneg %p107
        %p252 = pneg %p104
        %p253 = pneg %p133
        %p254 = pneg %p130
        %s255 = sand.u32 %s120, 1
        %s256 = scalar_lea.sflag [#allocation4], %s255
        %s257 = sand.u32 %s120, 1
        %s258 = smul.addr %s257, 16
        %s259 = scalar_lea.vmem [#allocation10], %s258
        %v261 = vld [vmem:[%s223] sm:$0xf]
        %v262 = vld [vmem:[%s223 + $0x4] sm:$0xf]
        %v263 = vld [vmem:[#allocation5] sm:$0xf]
        %v264 = vld [vmem:[#allocation5 + $0x4] sm:$0xf]
        %v265 = vld [vmem:[#allocation5 + $0x8] sm:$0xf]
        %v266 = vld [vmem:[#allocation5 + $0xc] sm:$0xf]
        %v269 = vunpack.c.l.b16 %v261
        %v270 = vunpack.c.l.b16 %v262
        %v271 = vpack.c.b16 %v270, %v269
        %v276 = vunpack.c.l.b16 %v263
        %v277 = vunpack.c.l.b16 %v264
        %v278 = vunpack.c.l.b16 %v265
        %v279 = vunpack.c.l.b16 %v266
        %v280 = vpack.c.b16 %v277, %v276
        %v281 = vpack.c.b16 %v279, %v278
        %vm284 = vcmask 261120
        %v286 = vsel %vm284, %v271, 0
        %288 = vmatprep.subr.bf16.mxu0 0
        %289 = vmatpush1.bf16.msra.mxu0 %v280
        %290 = vmatprep.subr.bf16.mxu0 0
        %291 = vmatpush1.bf16.msra.mxu0 %v281
        %292 = vmatprep.subr.bf16.mxu0 0
        %293 = vmatpush1.bf16.msra.mxu0 0
        %294 = vmatprep.subr.bf16.mxu0 0
        %295 = vmatpush1.bf16.msra.mxu0 0
        %296 = vmatprep.subr.bf16.mxu0 0
        %297 = vmatpush1.bf16.msra.mxu0 0
        %298 = vmatprep.subr.bf16.mxu0 0
        %299 = vmatpush1.bf16.msra.mxu0 0
        %300 = vmatprep.subr.bf16.mxu0 0
        %301 = vmatpush1.bf16.msra.mxu0 0
        %302 = vmatprep.subr.bf16.mxu0 0
        %303 = vmatpush1.bf16.msra.mxu0 0
        %304 = vmatprep.subr.bf16.mxu0 0
        %305 = vmatpush1.bf16.msra.mxu0 0
        %306 = vmatprep.subr.bf16.mxu0 0
        %307 = vmatpush1.bf16.msra.mxu0 0
        %308 = vmatprep.subr.bf16.mxu0 0
        %309 = vmatpush1.bf16.msra.mxu0 0
        %310 = vmatprep.subr.bf16.mxu0 0
        %311 = vmatpush1.bf16.msra.mxu0 0
        %312 = vmatprep.subr.bf16.mxu0 0
        %313 = vmatpush1.bf16.msra.mxu0 0
        %314 = vmatprep.subr.bf16.mxu0 0
        %315 = vmatpush1.bf16.msra.mxu0 0
        %316 = vmatprep.subr.bf16.mxu0 0
        %317 = vmatpush1.bf16.msra.mxu0 0
        %318 = vmatprep.subr.bf16.mxu0 0
        %319 = vmatpush1.bf16.msra.mxu0 0
        %320 = vmatprep.mubr.bf16.mxu0 0
        %321 = vmatmul.mubr.bf16.gmra.mrb[0].mxu0 %v286
        %v322 = vpop.f32.mrb[0].mxu0
        %v323 = vadd.f32 0.0, %v322
        %v324 = vpop.f32.mrb[0].mxu0
        %v325 = vpop.f32.mrb[0].mxu0
        %v326 = vadd.f32 0.0, %v325
        %v327 = vpop.f32.mrb[0].mxu0
        %328 = vdwg.mxu0
        %v329 = vpack.c.bf16 %v326, %v323
        %v330 = vld [vmem:[#allocation7] sm:$0xf]
        %v331 = vld [vmem:[#allocation7 + $0x4] sm:$0xf]
        %v332 = vld [vmem:[#allocation7 + $0x8] sm:$0xf]
        %v333 = vld [vmem:[#allocation7 + $0xc] sm:$0xf]
        %v338 = vunpack.c.l.b16 %v330
        %v339 = vunpack.c.l.b16 %v331
        %v340 = vunpack.c.l.b16 %v332
        %v341 = vunpack.c.l.b16 %v333
        %v342 = vpack.c.b16 %v339, %v338
        %v343 = vpack.c.b16 %v341, %v340
        %346 = vmatprep.subr.bf16.mxu0 0
        %347 = vmatpush1.bf16.msra.mxu0 %v342
        %348 = vmatprep.subr.bf16.mxu0 0
        %349 = vmatpush1.bf16.msra.mxu0 %v343
        %350 = vmatprep.subr.bf16.mxu0 0
        %351 = vmatpush1.bf16.msra.mxu0 0
        %352 = vmatprep.subr.bf16.mxu0 0
        %353 = vmatpush1.bf16.msra.mxu0 0
        %354 = vmatprep.subr.bf16.mxu0 0
        %355 = vmatpush1.bf16.msra.mxu0 0
        %356 = vmatprep.subr.bf16.mxu0 0
        %357 = vmatpush1.bf16.msra.mxu0 0
        %358 = vmatprep.subr.bf16.mxu0 0
        %359 = vmatpush1.bf16.msra.mxu0 0
        %360 = vmatprep.subr.bf16.mxu0 0
        %361 = vmatpush1.bf16.msra.mxu0 0
        %362 = vmatprep.subr.bf16.mxu0 0
        %363 = vmatpush1.bf16.msra.mxu0 0
        %364 = vmatprep.subr.bf16.mxu0 0
        %365 = vmatpush1.bf16.msra.mxu0 0
        %366 = vmatprep.subr.bf16.mxu0 0
        %367 = vmatpush1.bf16.msra.mxu0 0
        %368 = vmatprep.subr.bf16.mxu0 0
        %369 = vmatpush1.bf16.msra.mxu0 0
        %370 = vmatprep.subr.bf16.mxu0 0
        %371 = vmatpush1.bf16.msra.mxu0 0
        %372 = vmatprep.subr.bf16.mxu0 0
        %373 = vmatpush1.bf16.msra.mxu0 0
        %374 = vmatprep.subr.bf16.mxu0 0
        %375 = vmatpush1.bf16.msra.mxu0 0
        %376 = vmatprep.subr.bf16.mxu0 0
        %377 = vmatpush1.bf16.msra.mxu0 0
        %378 = vmatprep.mubr.bf16.mxu0 0
        %379 = vmatmul.mubr.bf16.gmra.mrb[0].mxu0 %v286
        %v380 = vpop.f32.mrb[0].mxu0
        %v381 = vadd.f32 0.0, %v380
        %v382 = vpop.f32.mrb[0].mxu0
        %v383 = vpop.f32.mrb[0].mxu0
        %v384 = vadd.f32 0.0, %v383
        %v385 = vpop.f32.mrb[0].mxu0
        %386 = vdwg.mxu0
        %v387 = vpack.c.bf16 %v384, %v381
        %v388 = vld [vmem:[#allocation8] sm:$0xf]
        %v389 = vld [vmem:[#allocation8 + $0x4] sm:$0xf]
        %v390 = vld [vmem:[#allocation8 + $0x8] sm:$0xf]
        %v391 = vld [vmem:[#allocation8 + $0xc] sm:$0xf]
        %v396 = vunpack.c.l.b16 %v388
        %v397 = vunpack.c.l.b16 %v389
        %v398 = vunpack.c.l.b16 %v390
        %v399 = vunpack.c.l.b16 %v391
        %v400 = vpack.c.b16 %v397, %v396
        %v401 = vpack.c.b16 %v399, %v398
        %404 = vmatprep.subr.bf16.mxu0 0
        %405 = vmatpush1.bf16.msra.mxu0 %v400
        %406 = vmatprep.subr.bf16.mxu0 0
        %407 = vmatpush1.bf16.msra.mxu0 %v401
        %408 = vmatprep.subr.bf16.mxu0 0
        %409 = vmatpush1.bf16.msra.mxu0 0
        %410 = vmatprep.subr.bf16.mxu0 0
        %411 = vmatpush1.bf16.msra.mxu0 0
        %412 = vmatprep.subr.bf16.mxu0 0
        %413 = vmatpush1.bf16.msra.mxu0 0
        %414 = vmatprep.subr.bf16.mxu0 0
        %415 = vmatpush1.bf16.msra.mxu0 0
        %416 = vmatprep.subr.bf16.mxu0 0
        %417 = vmatpush1.bf16.msra.mxu0 0
        %418 = vmatprep.subr.bf16.mxu0 0
        %419 = vmatpush1.bf16.msra.mxu0 0
        %420 = vmatprep.subr.bf16.mxu0 0
        %421 = vmatpush1.bf16.msra.mxu0 0
        %422 = vmatprep.subr.bf16.mxu0 0
        %423 = vmatpush1.bf16.msra.mxu0 0
        %424 = vmatprep.subr.bf16.mxu0 0
        %425 = vmatpush1.bf16.msra.mxu0 0
        %426 = vmatprep.subr.bf16.mxu0 0
        %427 = vmatpush1.bf16.msra.mxu0 0
        %428 = vmatprep.subr.bf16.mxu0 0
        %429 = vmatpush1.bf16.msra.mxu0 0
        %430 = vmatprep.subr.bf16.mxu0 0
        %431 = vmatpush1.bf16.msra.mxu0 0
        %432 = vmatprep.subr.bf16.mxu0 0
        %433 = vmatpush1.bf16.msra.mxu0 0
        %434 = vmatprep.subr.bf16.mxu0 0
        %435 = vmatpush1.bf16.msra.mxu0 0
        %436 = vmatprep.mubr.bf16.mxu0 0
        %437 = vmatmul.mubr.bf16.gmra.mrb[0].mxu0 %v286
        %v438 = vpop.f32.mrb[0].mxu0
        %v439 = vadd.f32 0.0, %v438
        %v440 = vpop.f32.mrb[0].mxu0
        %v441 = vpop.f32.mrb[0].mxu0
        %v442 = vadd.f32 0.0, %v441
        %v443 = vpop.f32.mrb[0].mxu0
        %444 = vdwg.mxu0
        %v445 = vpack.c.bf16 %v442, %v439
        %447 = vrot.lane.b32.xlu0 %v329, 124
        %v448 = vpop.permute.xlu0 %447
        %449 = vrot.lane.b32.xlu0 %v329, 120
        %v450 = vpop.permute.xlu0 %449
        %451 = vrot.lane.b32.xlu0 %v329, 116
        %v452 = vpop.permute.xlu0 %451
        %453 = vrot.lane.b32.xlu0 %v329, 112
        %v454 = vpop.permute.xlu0 %453
        %455 = vrot.lane.b32.xlu0 %v329, 108
        %v456 = vpop.permute.xlu0 %455
        %457 = vrot.lane.b32.xlu0 %v329, 104
        %v458 = vpop.permute.xlu0 %457
        %459 = vrot.lane.b32.xlu0 %v329, 100
        %v460 = vpop.permute.xlu0 %459
        %462 = vrot.lane.b32.xlu0 %v387, 124
        %v463 = vpop.permute.xlu0 %462
        %464 = vrot.lane.b32.xlu0 %v387, 120
        %v465 = vpop.permute.xlu0 %464
        %466 = vrot.lane.b32.xlu0 %v387, 116
        %v467 = vpop.permute.xlu0 %466
        %468 = vrot.lane.b32.xlu0 %v387, 112
        %v469 = vpop.permute.xlu0 %468
        %470 = vrot.lane.b32.xlu0 %v387, 108
        %v471 = vpop.permute.xlu0 %470
        %472 = vrot.lane.b32.xlu0 %v387, 104
        %v473 = vpop.permute.xlu0 %472
        %474 = vrot.lane.b32.xlu0 %v387, 100
        %v475 = vpop.permute.xlu0 %474
        %477 = vrot.lane.b32.xlu0 %v445, 124
        %v478 = vpop.permute.xlu0 %477
        %480 = vrot.lane.b32.xlu0 %v445, 120
        %v481 = vpop.permute.xlu0 %480
        %483 = vrot.lane.b32.xlu0 %v445, 116
        %v484 = vpop.permute.xlu0 %483
        %486 = vrot.lane.b32.xlu0 %v445, 112
        %v487 = vpop.permute.xlu0 %486
        %489 = vrot.lane.b32.xlu0 %v445, 108
        %v490 = vpop.permute.xlu0 %489
        %492 = vrot.lane.b32.xlu0 %v445, 104
        %v493 = vpop.permute.xlu0 %492
        %495 = vrot.lane.b32.xlu0 %v445, 100
        %v496 = vpop.permute.xlu0 %495
        %vm498 = vcmask 31744
        %v500 = vsel %vm498, %v329, 0
        %v503 = vsel %vm498, %v387, 0
        %505 = vmatprep.subr.bf16.mxu0 0
        %506 = vmatpush1.bf16.xpose.msra.mxu0 %v503
        %507 = vmatprep.subr.bf16.mxu0 0
        %508 = vmatpush1.bf16.xpose.msra.mxu0 0
        %509 = vmatprep.subr.bf16.mxu0 0
        %510 = vmatpush1.bf16.xpose.msra.mxu0 0
        %511 = vmatprep.subr.bf16.mxu0 0
        %512 = vmatpush1.bf16.xpose.msra.mxu0 0
        %513 = vmatprep.subr.bf16.mxu0 0
        %514 = vmatpush1.bf16.xpose.msra.mxu0 0
        %515 = vmatprep.subr.bf16.mxu0 0
        %516 = vmatpush1.bf16.xpose.msra.mxu0 0
        %517 = vmatprep.subr.bf16.mxu0 0
        %518 = vmatpush1.bf16.xpose.msra.mxu0 0
        %519 = vmatprep.subr.bf16.mxu0 0
        %520 = vmatpush1.bf16.xpose.msra.mxu0 0
        %521 = vmatprep.subr.bf16.mxu0 0
        %522 = vmatpush1.bf16.xpose.msra.mxu0 0
        %523 = vmatprep.subr.bf16.mxu0 0
        %524 = vmatpush1.bf16.xpose.msra.mxu0 0
        %525 = vmatprep.subr.bf16.mxu0 0
        %526 = vmatpush1.bf16.xpose.msra.mxu0 0
        %527 = vmatprep.subr.bf16.mxu0 0
        %528 = vmatpush1.bf16.xpose.msra.mxu0 0
        %529 = vmatprep.subr.bf16.mxu0 0
        %530 = vmatpush1.bf16.xpose.msra.mxu0 0
        %531 = vmatprep.subr.bf16.mxu0 0
        %532 = vmatpush1.bf16.xpose.msra.mxu0 0
        %533 = vmatprep.subr.bf16.mxu0 0
        %534 = vmatpush1.bf16.xpose.msra.mxu0 0
        %535 = vmatprep.subr.bf16.mxu0 0
        %536 = vmatpush1.bf16.xpose.msra.mxu0 0
        %537 = vmatprep.mubr.bf16.mxu0 0
        %538 = vmatmul.mubr.bf16.gmra.mrb[0].mxu0 %v500
        %v539 = vpop.f32.mrb[0].mxu0
        %v540 = vadd.f32 0.0, %v539
        %v541 = vpop.f32.mrb[0].mxu0
        %v542 = vpop.f32.mrb[0].mxu0
        %v543 = vadd.f32 0.0, %v542
        %v544 = vpop.f32.mrb[0].mxu0
        %545 = vdwg.mxu0
        %v547 = vsel %vm498, %v448, 0
        %v550 = vsel %vm498, %v463, 0
        %552 = vmatprep.subr.bf16.mxu0 0
        %553 = vmatpush1.bf16.xpose.msra.mxu0 %v550
        %554 = vmatprep.subr.bf16.mxu0 0
        %555 = vmatpush1.bf16.xpose.msra.mxu0 0
        %556 = vmatprep.subr.bf16.mxu0 0
        %557 = vmatpush1.bf16.xpose.msra.mxu0 0
        %558 = vmatprep.subr.bf16.mxu0 0
        %559 = vmatpush1.bf16.xpose.msra.mxu0 0
        %560 = vmatprep.subr.bf16.mxu0 0
        %561 = vmatpush1.bf16.xpose.msra.mxu0 0
        %562 = vmatprep.subr.bf16.mxu0 0
        %563 = vmatpush1.bf16.xpose.msra.mxu0 0
        %564 = vmatprep.subr.bf16.mxu0 0
        %565 = vmatpush1.bf16.xpose.msra.mxu0 0
        %566 = vmatprep.subr.bf16.mxu0 0
        %567 = vmatpush1.bf16.xpose.msra.mxu0 0
        %568 = vmatprep.subr.bf16.mxu0 0
        %569 = vmatpush1.bf16.xpose.msra.mxu0 0
        %570 = vmatprep.subr.bf16.mxu0 0
        %571 = vmatpush1.bf16.xpose.msra.mxu0 0
        %572 = vmatprep.subr.bf16.mxu0 0
        %573 = vmatpush1.bf16.xpose.msra.mxu0 0
        %574 = vmatprep.subr.bf16.mxu0 0
        %575 = vmatpush1.bf16.xpose.msra.mxu0 0
        %576 = vmatprep.subr.bf16.mxu0 0
        %577 = vmatpush1.bf16.xpose.msra.mxu0 0
        %578 = vmatprep.subr.bf16.mxu0 0
        %579 = vmatpush1.bf16.xpose.msra.mxu0 0
        %580 = vmatprep.subr.bf16.mxu0 0
        %581 = vmatpush1.bf16.xpose.msra.mxu0 0
        %582 = vmatprep.subr.bf16.mxu0 0
        %583 = vmatpush1.bf16.xpose.msra.mxu0 0
        %584 = vmatprep.mubr.bf16.mxu0 0
        %585 = vmatmul.mubr.bf16.gmra.mrb[0].mxu0 %v547
        %v586 = vpop.f32.mrb[0].mxu0
        %v587 = vadd.f32 0.0, %v586
        %v588 = vpop.f32.mrb[0].mxu0
        %v589 = vpop.f32.mrb[0].mxu0
        %v590 = vadd.f32 0.0, %v589
        %v591 = vpop.f32.mrb[0].mxu0
        %592 = vdwg.mxu0
        %v594 = vsel %vm498, %v450, 0
        %v597 = vsel %vm498, %v465, 0
        %599 = vmatprep.subr.bf16.mxu0 0
        %600 = vmatpush1.bf16.xpose.msra.mxu0 %v597
        %601 = vmatprep.subr.bf16.mxu0 0
        %602 = vmatpush1.bf16.xpose.msra.mxu0 0
        %603 = vmatprep.subr.bf16.mxu0 0
        %604 = vmatpush1.bf16.xpose.msra.mxu0 0
        %605 = vmatprep.subr.bf16.mxu0 0
        %606 = vmatpush1.bf16.xpose.msra.mxu0 0
        %607 = vmatprep.subr.bf16.mxu0 0
        %608 = vmatpush1.bf16.xpose.msra.mxu0 0
        %609 = vmatprep.subr.bf16.mxu0 0
        %610 = vmatpush1.bf16.xpose.msra.mxu0 0
        %611 = vmatprep.subr.bf16.mxu0 0
        %612 = vmatpush1.bf16.xpose.msra.mxu0 0
        %613 = vmatprep.subr.bf16.mxu0 0
        %614 = vmatpush1.bf16.xpose.msra.mxu0 0
        %615 = vmatprep.subr.bf16.mxu0 0
        %616 = vmatpush1.bf16.xpose.msra.mxu0 0
        %617 = vmatprep.subr.bf16.mxu0 0
        %618 = vmatpush1.bf16.xpose.msra.mxu0 0
        %619 = vmatprep.subr.bf16.mxu0 0
        %620 = vmatpush1.bf16.xpose.msra.mxu0 0
        %621 = vmatprep.subr.bf16.mxu0 0
        %622 = vmatpush1.bf16.xpose.msra.mxu0 0
        %623 = vmatprep.subr.bf16.mxu0 0
        %624 = vmatpush1.bf16.xpose.msra.mxu0 0
        %625 = vmatprep.subr.bf16.mxu0 0
        %626 = vmatpush1.bf16.xpose.msra.mxu0 0
        %627 = vmatprep.subr.bf16.mxu0 0
        %628 = vmatpush1.bf16.xpose.msra.mxu0 0
        %629 = vmatprep.subr.bf16.mxu0 0
        %630 = vmatpush1.bf16.xpose.msra.mxu0 0
        %631 = vmatprep.mubr.bf16.mxu0 0
        %632 = vmatmul.mubr.bf16.gmra.mrb[0].mxu0 %v594
        %v633 = vpop.f32.mrb[0].mxu0
        %v634 = vadd.f32 0.0, %v633
        %v635 = vpop.f32.mrb[0].mxu0
        %v636 = vpop.f32.mrb[0].mxu0
        %v637 = vadd.f32 0.0, %v636
        %v638 = vpop.f32.mrb[0].mxu0
        %639 = vdwg.mxu0
        %v641 = vsel %vm498, %v452, 0
        %v644 = vsel %vm498, %v467, 0
        %646 = vmatprep.subr.bf16.mxu0 0
        %647 = vmatpush1.bf16.xpose.msra.mxu0 %v644
        %648 = vmatprep.subr.bf16.mxu0 0
        %649 = vmatpush1.bf16.xpose.msra.mxu0 0
        %650 = vmatprep.subr.bf16.mxu0 0
        %651 = vmatpush1.bf16.xpose.msra.mxu0 0
        %652 = vmatprep.subr.bf16.mxu0 0
        %653 = vmatpush1.bf16.xpose.msra.mxu0 0
        %654 = vmatprep.subr.bf16.mxu0 0
        %655 = vmatpush1.bf16.xpose.msra.mxu0 0
        %656 = vmatprep.subr.bf16.mxu0 0
        %657 = vmatpush1.bf16.xpose.msra.mxu0 0
        %658 = vmatprep.subr.bf16.mxu0 0
        %659 = vmatpush1.bf16.xpose.msra.mxu0 0
        %660 = vmatprep.subr.bf16.mxu0 0
        %661 = vmatpush1.bf16.xpose.msra.mxu0 0
        %662 = vmatprep.subr.bf16.mxu0 0
        %663 = vmatpush1.bf16.xpose.msra.mxu0 0
        %664 = vmatprep.subr.bf16.mxu0 0
        %665 = vmatpush1.bf16.xpose.msra.mxu0 0
        %666 = vmatprep.subr.bf16.mxu0 0
        %667 = vmatpush1.bf16.xpose.msra.mxu0 0
        %668 = vmatprep.subr.bf16.mxu0 0
        %669 = vmatpush1.bf16.xpose.msra.mxu0 0
        %670 = vmatprep.subr.bf16.mxu0 0
        %671 = vmatpush1.bf16.xpose.msra.mxu0 0
        %672 = vmatprep.subr.bf16.mxu0 0
        %673 = vmatpush1.bf16.xpose.msra.mxu0 0
        %674 = vmatprep.subr.bf16.mxu0 0
        %675 = vmatpush1.bf16.xpose.msra.mxu0 0
        %676 = vmatprep.subr.bf16.mxu0 0
        %677 = vmatpush1.bf16.xpose.msra.mxu0 0
        %678 = vmatprep.mubr.bf16.mxu0 0
        %679 = vmatmul.mubr.bf16.gmra.mrb[0].mxu0 %v641
        %v680 = vpop.f32.mrb[0].mxu0
        %v681 = vadd.f32 0.0, %v680
        %v682 = vpop.f32.mrb[0].mxu0
        %v683 = vpop.f32.mrb[0].mxu0
        %v684 = vadd.f32 0.0, %v683
        %v685 = vpop.f32.mrb[0].mxu0
        %686 = vdwg.mxu0
        %v688 = vsel %vm498, %v454, 0
        %v691 = vsel %vm498, %v469, 0
        %693 = vmatprep.subr.bf16.mxu0 0
        %694 = vmatpush1.bf16.xpose.msra.mxu0 %v691
        %695 = vmatprep.subr.bf16.mxu0 0
        %696 = vmatpush1.bf16.xpose.msra.mxu0 0
        %697 = vmatprep.subr.bf16.mxu0 0
        %698 = vmatpush1.bf16.xpose.msra.mxu0 0
        %699 = vmatprep.subr.bf16.mxu0 0
        %700 = vmatpush1.bf16.xpose.msra.mxu0 0
        %701 = vmatprep.subr.bf16.mxu0 0
        %702 = vmatpush1.bf16.xpose.msra.mxu0 0
        %703 = vmatprep.subr.bf16.mxu0 0
        %704 = vmatpush1.bf16.xpose.msra.mxu0 0
        %705 = vmatprep.subr.bf16.mxu0 0
        %706 = vmatpush1.bf16.xpose.msra.mxu0 0
        %707 = vmatprep.subr.bf16.mxu0 0
        %708 = vmatpush1.bf16.xpose.msra.mxu0 0
        %709 = vmatprep.subr.bf16.mxu0 0
        %710 = vmatpush1.bf16.xpose.msra.mxu0 0
        %711 = vmatprep.subr.bf16.mxu0 0
        %712 = vmatpush1.bf16.xpose.msra.mxu0 0
        %713 = vmatprep.subr.bf16.mxu0 0
        %714 = vmatpush1.bf16.xpose.msra.mxu0 0
        %715 = vmatprep.subr.bf16.mxu0 0
        %716 = vmatpush1.bf16.xpose.msra.mxu0 0
        %717 = vmatprep.subr.bf16.mxu0 0
        %718 = vmatpush1.bf16.xpose.msra.mxu0 0
        %719 = vmatprep.subr.bf16.mxu0 0
        %720 = vmatpush1.bf16.xpose.msra.mxu0 0
        %721 = vmatprep.subr.bf16.mxu0 0
        %722 = vmatpush1.bf16.xpose.msra.mxu0 0
        %723 = vmatprep.subr.bf16.mxu0 0
        %724 = vmatpush1.bf16.xpose.msra.mxu0 0
        %725 = vmatprep.mubr.bf16.mxu0 0
        %726 = vmatmul.mubr.bf16.gmra.mrb[0].mxu0 %v688
        %v727 = vpop.f32.mrb[0].mxu0
        %v728 = vadd.f32 0.0, %v727
        %v729 = vpop.f32.mrb[0].mxu0
        %v730 = vpop.f32.mrb[0].mxu0
        %v731 = vadd.f32 0.0, %v730
        %v732 = vpop.f32.mrb[0].mxu0
        %733 = vdwg.mxu0
        %v735 = vsel %vm498, %v456, 0
        %v738 = vsel %vm498, %v471, 0
        %740 = vmatprep.subr.bf16.mxu0 0
        %741 = vmatpush1.bf16.xpose.msra.mxu0 %v738
        %742 = vmatprep.subr.bf16.mxu0 0
        %743 = vmatpush1.bf16.xpose.msra.mxu0 0
        %744 = vmatprep.subr.bf16.mxu0 0
        %745 = vmatpush1.bf16.xpose.msra.mxu0 0
        %746 = vmatprep.subr.bf16.mxu0 0
        %747 = vmatpush1.bf16.xpose.msra.mxu0 0
        %748 = vmatprep.subr.bf16.mxu0 0
        %749 = vmatpush1.bf16.xpose.msra.mxu0 0
        %750 = vmatprep.subr.bf16.mxu0 0
        %751 = vmatpush1.bf16.xpose.msra.mxu0 0
        %752 = vmatprep.subr.bf16.mxu0 0
        %753 = vmatpush1.bf16.xpose.msra.mxu0 0
        %754 = vmatprep.subr.bf16.mxu0 0
        %755 = vmatpush1.bf16.xpose.msra.mxu0 0
        %756 = vmatprep.subr.bf16.mxu0 0
        %757 = vmatpush1.bf16.xpose.msra.mxu0 0
        %758 = vmatprep.subr.bf16.mxu0 0
        %759 = vmatpush1.bf16.xpose.msra.mxu0 0
        %760 = vmatprep.subr.bf16.mxu0 0
        %761 = vmatpush1.bf16.xpose.msra.mxu0 0
        %762 = vmatprep.subr.bf16.mxu0 0
        %763 = vmatpush1.bf16.xpose.msra.mxu0 0
        %764 = vmatprep.subr.bf16.mxu0 0
        %765 = vmatpush1.bf16.xpose.msra.mxu0 0
        %766 = vmatprep.subr.bf16.mxu0 0
        %767 = vmatpush1.bf16.xpose.msra.mxu0 0
        %768 = vmatprep.subr.bf16.mxu0 0
        %769 = vmatpush1.bf16.xpose.msra.mxu0 0
        %770 = vmatprep.subr.bf16.mxu0 0
        %771 = vmatpush1.bf16.xpose.msra.mxu0 0
        %772 = vmatprep.mubr.bf16.mxu0 0
        %773 = vmatmul.mubr.bf16.gmra.mrb[0].mxu0 %v735
        %v774 = vpop.f32.mrb[0].mxu0
        %v775 = vadd.f32 0.0, %v774
        %v776 = vpop.f32.mrb[0].mxu0
        %v777 = vpop.f32.mrb[0].mxu0
        %v778 = vadd.f32 0.0, %v777
        %v779 = vpop.f32.mrb[0].mxu0
        %780 = vdwg.mxu0
        %v782 = vsel %vm498, %v458, 0
        %v785 = vsel %vm498, %v473, 0
        %787 = vmatprep.subr.bf16.mxu0 0
        %788 = vmatpush1.bf16.xpose.msra.mxu0 %v785
        %789 = vmatprep.subr.bf16.mxu0 0
        %790 = vmatpush1.bf16.xpose.msra.mxu0 0
        %791 = vmatprep.subr.bf16.mxu0 0
        %792 = vmatpush1.bf16.xpose.msra.mxu0 0
        %793 = vmatprep.subr.bf16.mxu0 0
        %794 = vmatpush1.bf16.xpose.msra.mxu0 0
        %795 = vmatprep.subr.bf16.mxu0 0
        %796 = vmatpush1.bf16.xpose.msra.mxu0 0
        %797 = vmatprep.subr.bf16.mxu0 0
        %798 = vmatpush1.bf16.xpose.msra.mxu0 0
        %799 = vmatprep.subr.bf16.mxu0 0
        %800 = vmatpush1.bf16.xpose.msra.mxu0 0
        %801 = vmatprep.subr.bf16.mxu0 0
        %802 = vmatpush1.bf16.xpose.msra.mxu0 0
        %803 = vmatprep.subr.bf16.mxu0 0
        %804 = vmatpush1.bf16.xpose.msra.mxu0 0
        %805 = vmatprep.subr.bf16.mxu0 0
        %806 = vmatpush1.bf16.xpose.msra.mxu0 0
        %807 = vmatprep.subr.bf16.mxu0 0
        %808 = vmatpush1.bf16.xpose.msra.mxu0 0
        %809 = vmatprep.subr.bf16.mxu0 0
        %810 = vmatpush1.bf16.xpose.msra.mxu0 0
        %811 = vmatprep.subr.bf16.mxu0 0
        %812 = vmatpush1.bf16.xpose.msra.mxu0 0
        %813 = vmatprep.subr.bf16.mxu0 0
        %814 = vmatpush1.bf16.xpose.msra.mxu0 0
        %815 = vmatprep.subr.bf16.mxu0 0
        %816 = vmatpush1.bf16.xpose.msra.mxu0 0
        %817 = vmatprep.subr.bf16.mxu0 0
        %818 = vmatpush1.bf16.xpose.msra.mxu0 0
        %819 = vmatprep.mubr.bf16.mxu0 0
        %820 = vmatmul.mubr.bf16.gmra.mrb[0].mxu0 %v782
        %v821 = vpop.f32.mrb[0].mxu0
        %v822 = vadd.f32 0.0, %v821
        %v823 = vpop.f32.mrb[0].mxu0
        %v824 = vpop.f32.mrb[0].mxu0
        %v825 = vadd.f32 0.0, %v824
        %v826 = vpop.f32.mrb[0].mxu0
        %827 = vdwg.mxu0
        %v829 = vsel %vm498, %v460, 0
        %v832 = vsel %vm498, %v475, 0
        %834 = vmatprep.subr.bf16.mxu0 0
        %835 = vmatpush1.bf16.xpose.msra.mxu0 %v832
        %836 = vmatprep.subr.bf16.mxu0 0
        %837 = vmatpush1.bf16.xpose.msra.mxu0 0
        %838 = vmatprep.subr.bf16.mxu0 0
        %839 = vmatpush1.bf16.xpose.msra.mxu0 0
        %840 = vmatprep.subr.bf16.mxu0 0
        %841 = vmatpush1.bf16.xpose.msra.mxu0 0
        %842 = vmatprep.subr.bf16.mxu0 0
        %843 = vmatpush1.bf16.xpose.msra.mxu0 0
        %844 = vmatprep.subr.bf16.mxu0 0
        %845 = vmatpush1.bf16.xpose.msra.mxu0 0
        %846 = vmatprep.subr.bf16.mxu0 0
        %847 = vmatpush1.bf16.xpose.msra.mxu0 0
        %848 = vmatprep.subr.bf16.mxu0 0
        %849 = vmatpush1.bf16.xpose.msra.mxu0 0
        %850 = vmatprep.subr.bf16.mxu0 0
        %851 = vmatpush1.bf16.xpose.msra.mxu0 0
        %852 = vmatprep.subr.bf16.mxu0 0
        %853 = vmatpush1.bf16.xpose.msra.mxu0 0
        %854 = vmatprep.subr.bf16.mxu0 0
        %855 = vmatpush1.bf16.xpose.msra.mxu0 0
        %856 = vmatprep.subr.bf16.mxu0 0
        %857 = vmatpush1.bf16.xpose.msra.mxu0 0
        %858 = vmatprep.subr.bf16.mxu0 0
        %859 = vmatpush1.bf16.xpose.msra.mxu0 0
        %860 = vmatprep.subr.bf16.mxu0 0
        %861 = vmatpush1.bf16.xpose.msra.mxu0 0
        %862 = vmatprep.subr.bf16.mxu0 0
        %863 = vmatpush1.bf16.xpose.msra.mxu0 0
        %864 = vmatprep.subr.bf16.mxu0 0
        %865 = vmatpush1.bf16.xpose.msra.mxu0 0
        %866 = vmatprep.mubr.bf16.mxu0 0
        %867 = vmatmul.mubr.bf16.gmra.mrb[0].mxu0 %v829
        %v868 = vpop.f32.mrb[0].mxu0
        %v869 = vadd.f32 0.0, %v868
        %v870 = vpop.f32.mrb[0].mxu0
        %v871 = vpop.f32.mrb[0].mxu0
        %v872 = vadd.f32 0.0, %v871
        %v873 = vpop.f32.mrb[0].mxu0
        %874 = vdwg.mxu0
        %vm875 = vcmask 130048
        %v876 = vsel %vm875, %v540, -inf
        %877 = vmax.xlane.f32.xlu0 %v876
        %v878 = vpop.xlane.xlu0 %877
        %v879 = vsel %vm875, %v543, -inf
        %880 = vmax.xlane.f32.xlu0 %v879
        %v881 = vpop.xlane.xlu0 %880
        %v882 = vsel %vm875, %v587, -inf
        %883 = vmax.xlane.f32.xlu0 %v882
        %v884 = vpop.xlane.xlu0 %883
        %v885 = vsel %vm875, %v590, -inf
        %886 = vmax.xlane.f32.xlu0 %v885
        %v887 = vpop.xlane.xlu0 %886
        %v888 = vsel %vm875, %v634, -inf
        %889 = vmax.xlane.f32.xlu0 %v888
        %v890 = vpop.xlane.xlu0 %889
        %v891 = vsel %vm875, %v637, -inf
        %892 = vmax.xlane.f32.xlu0 %v891
        %v893 = vpop.xlane.xlu0 %892
        %v894 = vsel %vm875, %v681, -inf
        %895 = vmax.xlane.f32.xlu0 %v894
        %v896 = vpop.xlane.xlu0 %895
        %v897 = vsel %vm875, %v684, -inf
        %898 = vmax.xlane.f32.xlu0 %v897
        %v899 = vpop.xlane.xlu0 %898
        %v900 = vsel %vm875, %v728, -inf
        %901 = vmax.xlane.f32.xlu0 %v900
        %v902 = vpop.xlane.xlu0 %901
        %v903 = vsel %vm875, %v731, -inf
        %904 = vmax.xlane.f32.xlu0 %v903
        %v905 = vpop.xlane.xlu0 %904
        %v906 = vsel %vm875, %v775, -inf
        %907 = vmax.xlane.f32.xlu0 %v906
        %v908 = vpop.xlane.xlu0 %907
        %v909 = vsel %vm875, %v778, -inf
        %910 = vmax.xlane.f32.xlu0 %v909
        %v911 = vpop.xlane.xlu0 %910
        %v912 = vsel %vm875, %v822, -inf
        %913 = vmax.xlane.f32.xlu0 %v912
        %v914 = vpop.xlane.xlu0 %913
        %v915 = vsel %vm875, %v825, -inf
        %916 = vmax.xlane.f32.xlu0 %v915
        %v917 = vpop.xlane.xlu0 %916
        %v918 = vsel %vm875, %v869, -inf
        %919 = vmax.xlane.f32.xlu0 %v918
        %v920 = vpop.xlane.xlu0 %919
        %v921 = vsel %vm875, %v872, -inf
        %922 = vmax.xlane.f32.xlu0 %v921
        %v923 = vpop.xlane.xlu0 %922
        %v924 = vsub.f32 %v540, %v878
        %v925 = vsub.f32 %v543, %v881
        %v926 = vsub.f32 %v587, %v884
        %v927 = vsub.f32 %v590, %v887
        %v928 = vsub.f32 %v634, %v890
        %v929 = vsub.f32 %v637, %v893
        %v930 = vsub.f32 %v681, %v896
        %v931 = vsub.f32 %v684, %v899
        %v932 = vsub.f32 %v728, %v902
        %v933 = vsub.f32 %v731, %v905
        %v934 = vsub.f32 %v775, %v908
        %v935 = vsub.f32 %v778, %v911
        %v936 = vsub.f32 %v822, %v914
        %v937 = vsub.f32 %v825, %v917
        %v938 = vsub.f32 %v869, %v920
        %v939 = vsub.f32 %v872, %v923
        %v940 = vmul.f32 %v924, 1.442695
        %v941 = vpow.pop %v940
        %v942 = vmul.f32 %v925, 1.442695
        %v943 = vpow.pop %v942
        %v944 = vmul.f32 %v926, 1.442695
        %v945 = vpow.pop %v944
        %v946 = vmul.f32 %v927, 1.442695
        %v947 = vpow.pop %v946
        %v948 = vmul.f32 %v928, 1.442695
        %v949 = vpow.pop %v948
        %v950 = vmul.f32 %v929, 1.442695
        %v951 = vpow.pop %v950
        %v952 = vmul.f32 %v930, 1.442695
        %v953 = vpow.pop %v952
        %v954 = vmul.f32 %v931, 1.442695
        %v955 = vpow.pop %v954
        %v956 = vmul.f32 %v932, 1.442695
        %v957 = vpow.pop %v956
        %v958 = vmul.f32 %v933, 1.442695
        %v959 = vpow.pop %v958
        %v960 = vmul.f32 %v934, 1.442695
        %v961 = vpow.pop %v960
        %v962 = vmul.f32 %v935, 1.442695
        %v963 = vpow.pop %v962
        %v964 = vmul.f32 %v936, 1.442695
        %v965 = vpow.pop %v964
        %v966 = vmul.f32 %v937, 1.442695
        %v967 = vpow.pop %v966
        %v968 = vmul.f32 %v938, 1.442695
        %v969 = vpow.pop %v968
        %v970 = vmul.f32 %v939, 1.442695
        %v971 = vpow.pop %v970
        %v972 = vsel %vm875, %v941, 0.0
        %973 = vadd.xlane.f32.xlu0 %v972
        %v974 = vpop.xlane.xlu0 %973
        %v975 = vsel %vm875, %v943, 0.0
        %976 = vadd.xlane.f32.xlu0 %v975
        %v977 = vpop.xlane.xlu0 %976
        %v978 = vsel %vm875, %v945, 0.0
        %979 = vadd.xlane.f32.xlu0 %v978
        %v980 = vpop.xlane.xlu0 %979
        %v981 = vsel %vm875, %v947, 0.0
        %982 = vadd.xlane.f32.xlu0 %v981
        %v983 = vpop.xlane.xlu0 %982
        %v984 = vsel %vm875, %v949, 0.0
        %985 = vadd.xlane.f32.xlu0 %v984
        %v986 = vpop.xlane.xlu0 %985
        %v987 = vsel %vm875, %v951, 0.0
        %988 = vadd.xlane.f32.xlu0 %v987
        %v989 = vpop.xlane.xlu0 %988
        %v990 = vsel %vm875, %v953, 0.0
        %991 = vadd.xlane.f32.xlu0 %v990
        %v992 = vpop.xlane.xlu0 %991
        %v993 = vsel %vm875, %v955, 0.0
        %994 = vadd.xlane.f32.xlu0 %v993
        %v995 = vpop.xlane.xlu0 %994
        %v996 = vsel %vm875, %v957, 0.0
        %997 = vadd.xlane.f32.xlu0 %v996
        %v998 = vpop.xlane.xlu0 %997
        %v999 = vsel %vm875, %v959, 0.0
        %1000 = vadd.xlane.f32.xlu0 %v999
        %v1001 = vpop.xlane.xlu0 %1000
        %v1002 = vsel %vm875, %v961, 0.0
        %1003 = vadd.xlane.f32.xlu0 %v1002
        %v1004 = vpop.xlane.xlu0 %1003
        %v1005 = vsel %vm875, %v963, 0.0
        %1006 = vadd.xlane.f32.xlu0 %v1005
        %v1007 = vpop.xlane.xlu0 %1006
        %v1008 = vsel %vm875, %v965, 0.0
        %1009 = vadd.xlane.f32.xlu0 %v1008
        %v1010 = vpop.xlane.xlu0 %1009
        %v1011 = vsel %vm875, %v967, 0.0
        %1012 = vadd.xlane.f32.xlu0 %v1011
        %v1013 = vpop.xlane.xlu0 %1012
        %v1014 = vsel %vm875, %v969, 0.0
        %1015 = vadd.xlane.f32.xlu0 %v1014
        %v1016 = vpop.xlane.xlu0 %1015
        %v1017 = vsel %vm875, %v971, 0.0
        %1018 = vadd.xlane.f32.xlu0 %v1017
        %v1019 = vpop.xlane.xlu0 %1018
        %v1020 = vpack.c.bf16 %v943, %v941
        %v1021 = vpack.c.bf16 %v947, %v945
        %v1022 = vpack.c.bf16 %v951, %v949
        %v1023 = vpack.c.bf16 %v955, %v953
        %v1024 = vpack.c.bf16 %v959, %v957
        %v1025 = vpack.c.bf16 %v963, %v961
        %v1026 = vpack.c.bf16 %v967, %v965
        %v1027 = vpack.c.bf16 %v971, %v969
        %v1029 = vsel %vm875, %v1020, 0
        %1031 = vmatprep.subr.bf16.mxu0 0
        %1032 = vmatpush1.bf16.msra.mxu0 %v445
        %1033 = vmatprep.subr.bf16.mxu0 0
        %1034 = vmatpush1.bf16.msra.mxu0 0
        %1035 = vmatprep.subr.bf16.mxu0 0
        %1036 = vmatpush1.bf16.msra.mxu0 0
        %1037 = vmatprep.subr.bf16.mxu0 0
        %1038 = vmatpush1.bf16.msra.mxu0 0
        %1039 = vmatprep.subr.bf16.mxu0 0
        %1040 = vmatpush1.bf16.msra.mxu0 0
        %1041 = vmatprep.subr.bf16.mxu0 0
        %1042 = vmatpush1.bf16.msra.mxu0 0
        %1043 = vmatprep.subr.bf16.mxu0 0
        %1044 = vmatpush1.bf16.msra.mxu0 0
        %1045 = vmatprep.subr.bf16.mxu0 0
        %1046 = vmatpush1.bf16.msra.mxu0 0
        %1047 = vmatprep.subr.bf16.mxu0 0
        %1048 = vmatpush1.bf16.msra.mxu0 0
        %1049 = vmatprep.subr.bf16.mxu0 0
        %1050 = vmatpush1.bf16.msra.mxu0 0
        %1051 = vmatprep.subr.bf16.mxu0 0
        %1052 = vmatpush1.bf16.msra.mxu0 0
        %1053 = vmatprep.subr.bf16.mxu0 0
        %1054 = vmatpush1.bf16.msra.mxu0 0
        %1055 = vmatprep.subr.bf16.mxu0 0
        %1056 = vmatpush1.bf16.msra.mxu0 0
        %1057 = vmatprep.subr.bf16.mxu0 0
        %1058 = vmatpush1.bf16.msra.mxu0 0
        %1059 = vmatprep.subr.bf16.mxu0 0
        %1060 = vmatpush1.bf16.msra.mxu0 0
        %1061 = vmatprep.subr.bf16.mxu0 0
        %1062 = vmatpush1.bf16.msra.mxu0 0
        %1063 = vmatprep.mubr.bf16.mxu0 0
        %1064 = vmatmul.mubr.bf16.gmra.mrb[0].mxu0 %v1029
        %v1065 = vpop.f32.mrb[0].mxu0
        %v1066 = vadd.f32 0.0, %v1065
        %v1067 = vpop.f32.mrb[0].mxu0
        %v1068 = vpop.f32.mrb[0].mxu0
        %v1069 = vadd.f32 0.0, %v1068
        %v1070 = vpop.f32.mrb[0].mxu0
        %1071 = vdwg.mxu0
        %v1073 = vsel %vm875, %v1021, 0
        %1075 = vmatprep.subr.bf16.mxu0 0
        %1076 = vmatpush1.bf16.msra.mxu0 %v478
        %1077 = vmatprep.subr.bf16.mxu0 0
        %1078 = vmatpush1.bf16.msra.mxu0 0
        %1079 = vmatprep.subr.bf16.mxu0 0
        %1080 = vmatpush1.bf16.msra.mxu0 0
        %1081 = vmatprep.subr.bf16.mxu0 0
        %1082 = vmatpush1.bf16.msra.mxu0 0
        %1083 = vmatprep.subr.bf16.mxu0 0
        %1084 = vmatpush1.bf16.msra.mxu0 0
        %1085 = vmatprep.subr.bf16.mxu0 0
        %1086 = vmatpush1.bf16.msra.mxu0 0
        %1087 = vmatprep.subr.bf16.mxu0 0
        %1088 = vmatpush1.bf16.msra.mxu0 0
        %1089 = vmatprep.subr.bf16.mxu0 0
        %1090 = vmatpush1.bf16.msra.mxu0 0
        %1091 = vmatprep.subr.bf16.mxu0 0
        %1092 = vmatpush1.bf16.msra.mxu0 0
        %1093 = vmatprep.subr.bf16.mxu0 0
        %1094 = vmatpush1.bf16.msra.mxu0 0
        %1095 = vmatprep.subr.bf16.mxu0 0
        %1096 = vmatpush1.bf16.msra.mxu0 0
        %1097 = vmatprep.subr.bf16.mxu0 0
        %1098 = vmatpush1.bf16.msra.mxu0 0
        %1099 = vmatprep.subr.bf16.mxu0 0
        %1100 = vmatpush1.bf16.msra.mxu0 0
        %1101 = vmatprep.subr.bf16.mxu0 0
        %1102 = vmatpush1.bf16.msra.mxu0 0
        %1103 = vmatprep.subr.bf16.mxu0 0
        %1104 = vmatpush1.bf16.msra.mxu0 0
        %1105 = vmatprep.subr.bf16.mxu0 0
        %1106 = vmatpush1.bf16.msra.mxu0 0
        %1107 = vmatprep.mubr.bf16.mxu0 0
        %1108 = vmatmul.mubr.bf16.gmra.mrb[0].mxu0 %v1073
        %v1109 = vpop.f32.mrb[0].mxu0
        %v1110 = vadd.f32 0.0, %v1109
        %v1111 = vpop.f32.mrb[0].mxu0
        %v1112 = vpop.f32.mrb[0].mxu0
        %v1113 = vadd.f32 0.0, %v1112
        %v1114 = vpop.f32.mrb[0].mxu0
        %1115 = vdwg.mxu0
        %v1117 = vsel %vm875, %v1022, 0
        %1119 = vmatprep.subr.bf16.mxu0 0
        %1120 = vmatpush1.bf16.msra.mxu0 %v481
        %1121 = vmatprep.subr.bf16.mxu0 0
        %1122 = vmatpush1.bf16.msra.mxu0 0
        %1123 = vmatprep.subr.bf16.mxu0 0
        %1124 = vmatpush1.bf16.msra.mxu0 0
        %1125 = vmatprep.subr.bf16.mxu0 0
        %1126 = vmatpush1.bf16.msra.mxu0 0
        %1127 = vmatprep.subr.bf16.mxu0 0
        %1128 = vmatpush1.bf16.msra.mxu0 0
        %1129 = vmatprep.subr.bf16.mxu0 0
        %1130 = vmatpush1.bf16.msra.mxu0 0
        %1131 = vmatprep.subr.bf16.mxu0 0
        %1132 = vmatpush1.bf16.msra.mxu0 0
        %1133 = vmatprep.subr.bf16.mxu0 0
        %1134 = vmatpush1.bf16.msra.mxu0 0
        %1135 = vmatprep.subr.bf16.mxu0 0
        %1136 = vmatpush1.bf16.msra.mxu0 0
        %1137 = vmatprep.subr.bf16.mxu0 0
        %1138 = vmatpush1.bf16.msra.mxu0 0
        %1139 = vmatprep.subr.bf16.mxu0 0
        %1140 = vmatpush1.bf16.msra.mxu0 0
        %1141 = vmatprep.subr.bf16.mxu0 0
        %1142 = vmatpush1.bf16.msra.mxu0 0
        %1143 = vmatprep.subr.bf16.mxu0 0
        %1144 = vmatpush1.bf16.msra.mxu0 0
        %1145 = vmatprep.subr.bf16.mxu0 0
        %1146 = vmatpush1.bf16.msra.mxu0 0
        %1147 = vmatprep.subr.bf16.mxu0 0
        %1148 = vmatpush1.bf16.msra.mxu0 0
        %1149 = vmatprep.subr.bf16.mxu0 0
        %1150 = vmatpush1.bf16.msra.mxu0 0
        %1151 = vmatprep.mubr.bf16.mxu0 0
        %1152 = vmatmul.mubr.bf16.gmra.mrb[0].mxu0 %v1117
        %v1153 = vpop.f32.mrb[0].mxu0
        %v1154 = vadd.f32 0.0, %v1153
        %v1155 = vpop.f32.mrb[0].mxu0
        %v1156 = vpop.f32.mrb[0].mxu0
        %v1157 = vadd.f32 0.0, %v1156
        %v1158 = vpop.f32.mrb[0].mxu0
        %1159 = vdwg.mxu0
        %v1161 = vsel %vm875, %v1023, 0
        %1163 = vmatprep.subr.bf16.mxu0 0
        %1164 = vmatpush1.bf16.msra.mxu0 %v484
        %1165 = vmatprep.subr.bf16.mxu0 0
        %1166 = vmatpush1.bf16.msra.mxu0 0
        %1167 = vmatprep.subr.bf16.mxu0 0
        %1168 = vmatpush1.bf16.msra.mxu0 0
        %1169 = vmatprep.subr.bf16.mxu0 0
        %1170 = vmatpush1.bf16.msra.mxu0 0
        %1171 = vmatprep.subr.bf16.mxu0 0
        %1172 = vmatpush1.bf16.msra.mxu0 0
        %1173 = vmatprep.subr.bf16.mxu0 0
        %1174 = vmatpush1.bf16.msra.mxu0 0
        %1175 = vmatprep.subr.bf16.mxu0 0
        %1176 = vmatpush1.bf16.msra.mxu0 0
        %1177 = vmatprep.subr.bf16.mxu0 0
        %1178 = vmatpush1.bf16.msra.mxu0 0
        %1179 = vmatprep.subr.bf16.mxu0 0
        %1180 = vmatpush1.bf16.msra.mxu0 0
        %1181 = vmatprep.subr.bf16.mxu0 0
        %1182 = vmatpush1.bf16.msra.mxu0 0
        %1183 = vmatprep.subr.bf16.mxu0 0
        %1184 = vmatpush1.bf16.msra.mxu0 0
        %1185 = vmatprep.subr.bf16.mxu0 0
        %1186 = vmatpush1.bf16.msra.mxu0 0
        %1187 = vmatprep.subr.bf16.mxu0 0
        %1188 = vmatpush1.bf16.msra.mxu0 0
        %1189 = vmatprep.subr.bf16.mxu0 0
        %1190 = vmatpush1.bf16.msra.mxu0 0
        %1191 = vmatprep.subr.bf16.mxu0 0
        %1192 = vmatpush1.bf16.msra.mxu0 0
        %1193 = vmatprep.subr.bf16.mxu0 0
        %1194 = vmatpush1.bf16.msra.mxu0 0
        %1195 = vmatprep.mubr.bf16.mxu0 0
        %1196 = vmatmul.mubr.bf16.gmra.mrb[0].mxu0 %v1161
        %v1197 = vpop.f32.mrb[0].mxu0
        %v1198 = vadd.f32 0.0, %v1197
        %v1199 = vpop.f32.mrb[0].mxu0
        %v1200 = vpop.f32.mrb[0].mxu0
        %v1201 = vadd.f32 0.0, %v1200
        %v1202 = vpop.f32.mrb[0].mxu0
        %1203 = vdwg.mxu0
        %v1205 = vsel %vm875, %v1024, 0
        %1207 = vmatprep.subr.bf16.mxu0 0
        %1208 = vmatpush1.bf16.msra.mxu0 %v487
        %1209 = vmatprep.subr.bf16.mxu0 0
        %1210 = vmatpush1.bf16.msra.mxu0 0
        %1211 = vmatprep.subr.bf16.mxu0 0
        %1212 = vmatpush1.bf16.msra.mxu0 0
        %1213 = vmatprep.subr.bf16.mxu0 0
        %1214 = vmatpush1.bf16.msra.mxu0 0
        %1215 = vmatprep.subr.bf16.mxu0 0
        %1216 = vmatpush1.bf16.msra.mxu0 0
        %1217 = vmatprep.subr.bf16.mxu0 0
        %1218 = vmatpush1.bf16.msra.mxu0 0
        %1219 = vmatprep.subr.bf16.mxu0 0
        %1220 = vmatpush1.bf16.msra.mxu0 0
        %1221 = vmatprep.subr.bf16.mxu0 0
        %1222 = vmatpush1.bf16.msra.mxu0 0
        %1223 = vmatprep.subr.bf16.mxu0 0
        %1224 = vmatpush1.bf16.msra.mxu0 0
        %1225 = vmatprep.subr.bf16.mxu0 0
        %1226 = vmatpush1.bf16.msra.mxu0 0
        %1227 = vmatprep.subr.bf16.mxu0 0
        %1228 = vmatpush1.bf16.msra.mxu0 0
        %1229 = vmatprep.subr.bf16.mxu0 0
        %1230 = vmatpush1.bf16.msra.mxu0 0
        %1231 = vmatprep.subr.bf16.mxu0 0
        %1232 = vmatpush1.bf16.msra.mxu0 0
        %1233 = vmatprep.subr.bf16.mxu0 0
        %1234 = vmatpush1.bf16.msra.mxu0 0
        %1235 = vmatprep.subr.bf16.mxu0 0
        %1236 = vmatpush1.bf16.msra.mxu0 0
        %1237 = vmatprep.subr.bf16.mxu0 0
        %1238 = vmatpush1.bf16.msra.mxu0 0
        %1239 = vmatprep.mubr.bf16.mxu0 0
        %1240 = vmatmul.mubr.bf16.gmra.mrb[0].mxu0 %v1205
        %v1241 = vpop.f32.mrb[0].mxu0
        %v1242 = vadd.f32 0.0, %v1241
        %v1243 = vpop.f32.mrb[0].mxu0
        %v1244 = vpop.f32.mrb[0].mxu0
        %v1245 = vadd.f32 0.0, %v1244
        %v1246 = vpop.f32.mrb[0].mxu0
        %1247 = vdwg.mxu0
        %v1249 = vsel %vm875, %v1025, 0
        %1251 = vmatprep.subr.bf16.mxu0 0
        %1252 = vmatpush1.bf16.msra.mxu0 %v490
        %1253 = vmatprep.subr.bf16.mxu0 0
        %1254 = vmatpush1.bf16.msra.mxu0 0
        %1255 = vmatprep.subr.bf16.mxu0 0
        %1256 = vmatpush1.bf16.msra.mxu0 0
        %1257 = vmatprep.subr.bf16.mxu0 0
        %1258 = vmatpush1.bf16.msra.mxu0 0
        %1259 = vmatprep.subr.bf16.mxu0 0
        %1260 = vmatpush1.bf16.msra.mxu0 0
        %1261 = vmatprep.subr.bf16.mxu0 0
        %1262 = vmatpush1.bf16.msra.mxu0 0
        %1263 = vmatprep.subr.bf16.mxu0 0
        %1264 = vmatpush1.bf16.msra.mxu0 0
        %1265 = vmatprep.subr.bf16.mxu0 0
        %1266 = vmatpush1.bf16.msra.mxu0 0
        %1267 = vmatprep.subr.bf16.mxu0 0
        %1268 = vmatpush1.bf16.msra.mxu0 0
        %1269 = vmatprep.subr.bf16.mxu0 0
        %1270 = vmatpush1.bf16.msra.mxu0 0
        %1271 = vmatprep.subr.bf16.mxu0 0
        %1272 = vmatpush1.bf16.msra.mxu0 0
        %1273 = vmatprep.subr.bf16.mxu0 0
        %1274 = vmatpush1.bf16.msra.mxu0 0
        %1275 = vmatprep.subr.bf16.mxu0 0
        %1276 = vmatpush1.bf16.msra.mxu0 0
        %1277 = vmatprep.subr.bf16.mxu0 0
        %1278 = vmatpush1.bf16.msra.mxu0 0
        %1279 = vmatprep.subr.bf16.mxu0 0
        %1280 = vmatpush1.bf16.msra.mxu0 0
        %1281 = vmatprep.subr.bf16.mxu0 0
        %1282 = vmatpush1.bf16.msra.mxu0 0
        %1283 = vmatprep.mubr.bf16.mxu0 0
        %1284 = vmatmul.mubr.bf16.gmra.mrb[0].mxu0 %v1249
        %v1285 = vpop.f32.mrb[0].mxu0
        %v1286 = vadd.f32 0.0, %v1285
        %v1287 = vpop.f32.mrb[0].mxu0
        %v1288 = vpop.f32.mrb[0].mxu0
        %v1289 = vadd.f32 0.0, %v1288
        %v1290 = vpop.f32.mrb[0].mxu0
        %1291 = vdwg.mxu0
        %v1293 = vsel %vm875, %v1026, 0
        %1295 = vmatprep.subr.bf16.mxu0 0
        %1296 = vmatpush1.bf16.msra.mxu0 %v493
        %1297 = vmatprep.subr.bf16.mxu0 0
        %1298 = vmatpush1.bf16.msra.mxu0 0
        %1299 = vmatprep.subr.bf16.mxu0 0
        %1300 = vmatpush1.bf16.msra.mxu0 0
        %1301 = vmatprep.subr.bf16.mxu0 0
        %1302 = vmatpush1.bf16.msra.mxu0 0
        %1303 = vmatprep.subr.bf16.mxu0 0
        %1304 = vmatpush1.bf16.msra.mxu0 0
        %1305 = vmatprep.subr.bf16.mxu0 0
        %1306 = vmatpush1.bf16.msra.mxu0 0
        %1307 = vmatprep.subr.bf16.mxu0 0
        %1308 = vmatpush1.bf16.msra.mxu0 0
        %1309 = vmatprep.subr.bf16.mxu0 0
        %1310 = vmatpush1.bf16.msra.mxu0 0
        %1311 = vmatprep.subr.bf16.mxu0 0
        %1312 = vmatpush1.bf16.msra.mxu0 0
        %1313 = vmatprep.subr.bf16.mxu0 0
        %1314 = vmatpush1.bf16.msra.mxu0 0
        %1315 = vmatprep.subr.bf16.mxu0 0
        %1316 = vmatpush1.bf16.msra.mxu0 0
        %1317 = vmatprep.subr.bf16.mxu0 0
        %1318 = vmatpush1.bf16.msra.mxu0 0
        %1319 = vmatprep.subr.bf16.mxu0 0
        %1320 = vmatpush1.bf16.msra.mxu0 0
        %1321 = vmatprep.subr.bf16.mxu0 0
        %1322 = vmatpush1.bf16.msra.mxu0 0
        %1323 = vmatprep.subr.bf16.mxu0 0
        %1324 = vmatpush1.bf16.msra.mxu0 0
        %1325 = vmatprep.subr.bf16.mxu0 0
        %1326 = vmatpush1.bf16.msra.mxu0 0
        %1327 = vmatprep.mubr.bf16.mxu0 0
        %1328 = vmatmul.mubr.bf16.gmra.mrb[0].mxu0 %v1293
        %v1329 = vpop.f32.mrb[0].mxu0
        %v1330 = vadd.f32 0.0, %v1329
        %v1331 = vpop.f32.mrb[0].mxu0
        %v1332 = vpop.f32.mrb[0].mxu0
        %v1333 = vadd.f32 0.0, %v1332
        %v1334 = vpop.f32.mrb[0].mxu0
        %1335 = vdwg.mxu0
        %v1337 = vsel %vm875, %v1027, 0
        %1339 = vmatprep.subr.bf16.mxu0 0
        %1340 = vmatpush1.bf16.msra.mxu0 %v496
        %1341 = vmatprep.subr.bf16.mxu0 0
        %1342 = vmatpush1.bf16.msra.mxu0 0
        %1343 = vmatprep.subr.bf16.mxu0 0
        %1344 = vmatpush1.bf16.msra.mxu0 0
        %1345 = vmatprep.subr.bf16.mxu0 0
        %1346 = vmatpush1.bf16.msra.mxu0 0
        %1347 = vmatprep.subr.bf16.mxu0 0
        %1348 = vmatpush1.bf16.msra.mxu0 0
        %1349 = vmatprep.subr.bf16.mxu0 0
        %1350 = vmatpush1.bf16.msra.mxu0 0
        %1351 = vmatprep.subr.bf16.mxu0 0
        %1352 = vmatpush1.bf16.msra.mxu0 0
        %1353 = vmatprep.subr.bf16.mxu0 0
        %1354 = vmatpush1.bf16.msra.mxu0 0
        %1355 = vmatprep.subr.bf16.mxu0 0
        %1356 = vmatpush1.bf16.msra.mxu0 0
        %1357 = vmatprep.subr.bf16.mxu0 0
        %1358 = vmatpush1.bf16.msra.mxu0 0
        %1359 = vmatprep.subr.bf16.mxu0 0
        %1360 = vmatpush1.bf16.msra.mxu0 0
        %1361 = vmatprep.subr.bf16.mxu0 0
        %1362 = vmatpush1.bf16.msra.mxu0 0
        %1363 = vmatprep.subr.bf16.mxu0 0
        %1364 = vmatpush1.bf16.msra.mxu0 0
        %1365 = vmatprep.subr.bf16.mxu0 0
        %1366 = vmatpush1.bf16.msra.mxu0 0
        %1367 = vmatprep.subr.bf16.mxu0 0
        %1368 = vmatpush1.bf16.msra.mxu0 0
        %1369 = vmatprep.subr.bf16.mxu0 0
        %1370 = vmatpush1.bf16.msra.mxu0 0
        %1371 = vmatprep.mubr.bf16.mxu0 0
        %1372 = vmatmul.mubr.bf16.gmra.mrb[0].mxu0 %v1337
        %v1373 = vpop.f32.mrb[0].mxu0
        %v1374 = vadd.f32 0.0, %v1373
        %v1375 = vpop.f32.mrb[0].mxu0
        %v1376 = vpop.f32.mrb[0].mxu0
        %v1377 = vadd.f32 0.0, %v1376
        %v1378 = vpop.f32.mrb[0].mxu0
        %1379 = vdwg.mxu0
        %v1380 = vrcp.pop %v974
        %v1381 = vrcp.pop %v977
        %v1382 = vrcp.pop %v980
        %v1383 = vrcp.pop %v983
        %v1384 = vrcp.pop %v986
        %v1385 = vrcp.pop %v989
        %v1386 = vrcp.pop %v992
        %v1387 = vrcp.pop %v995
        %v1388 = vrcp.pop %v998
        %v1389 = vrcp.pop %v1001
        %v1390 = vrcp.pop %v1004
        %v1391 = vrcp.pop %v1007
        %v1392 = vrcp.pop %v1010
        %v1393 = vrcp.pop %v1013
        %v1394 = vrcp.pop %v1016
        %v1395 = vrcp.pop %v1019
        %v1396 = vmul.f32 %v1066, %v1380
        %v1397 = vmul.f32 %v1069, %v1381
        %v1398 = vmul.f32 %v1110, %v1382
        %v1399 = vmul.f32 %v1113, %v1383
        %v1400 = vmul.f32 %v1154, %v1384
        %v1401 = vmul.f32 %v1157, %v1385
        %v1402 = vmul.f32 %v1198, %v1386
        %v1403 = vmul.f32 %v1201, %v1387
        %v1404 = vmul.f32 %v1242, %v1388
        %v1405 = vmul.f32 %v1245, %v1389
        %v1406 = vmul.f32 %v1286, %v1390
        %v1407 = vmul.f32 %v1289, %v1391
        %v1408 = vmul.f32 %v1330, %v1392
        %v1409 = vmul.f32 %v1333, %v1393
        %v1410 = vmul.f32 %v1374, %v1394
        %v1411 = vmul.f32 %v1377, %v1395
        %1414 = vrot.lane.b32.xlu0 %v1398, 4
        %v1415 = vpop.permute.xlu0 %1414
        %1416 = vrot.lane.b32.xlu0 %v1399, 4
        %v1417 = vpop.permute.xlu0 %1416
        %1422 = vrot.lane.b32.xlu0 %v1400, 8
        %v1423 = vpop.permute.xlu0 %1422
        %1424 = vrot.lane.b32.xlu0 %v1401, 8
        %v1425 = vpop.permute.xlu0 %1424
        %1430 = vrot.lane.b32.xlu0 %v1402, 12
        %v1431 = vpop.permute.xlu0 %1430
        %1432 = vrot.lane.b32.xlu0 %v1403, 12
        %v1433 = vpop.permute.xlu0 %1432
        %1438 = vrot.lane.b32.xlu0 %v1404, 16
        %v1439 = vpop.permute.xlu0 %1438
        %1440 = vrot.lane.b32.xlu0 %v1405, 16
        %v1441 = vpop.permute.xlu0 %1440
        %1446 = vrot.lane.b32.xlu0 %v1406, 20
        %v1447 = vpop.permute.xlu0 %1446
        %1448 = vrot.lane.b32.xlu0 %v1407, 20
        %v1449 = vpop.permute.xlu0 %1448
        %1454 = vrot.lane.b32.xlu0 %v1408, 24
        %v1455 = vpop.permute.xlu0 %1454
        %1456 = vrot.lane.b32.xlu0 %v1409, 24
        %v1457 = vpop.permute.xlu0 %1456
        %1462 = vrot.lane.b32.xlu0 %v1410, 28
        %v1463 = vpop.permute.xlu0 %1462
        %1464 = vrot.lane.b32.xlu0 %v1411, 28
        %v1465 = vpop.permute.xlu0 %1464
        %v1468 = vsel %vm498, %v1396, %v1415
        %v1469 = vsel %vm498, %v1397, %v1417
        %vm1470 = vcmask 64512
        %v1471 = vsel %vm1470, %v1468, %v1423
        %v1472 = vsel %vm1470, %v1469, %v1425
        %vm1473 = vcmask 97280
        %v1474 = vsel %vm1473, %v1471, %v1431
        %v1475 = vsel %vm1473, %v1472, %v1433
        %v1476 = vsel %vm875, %v1474, %v1439
        %v1477 = vsel %vm875, %v1475, %v1441
        %vm1478 = vcmask 162816
        %v1479 = vsel %vm1478, %v1476, %v1447
        %v1480 = vsel %vm1478, %v1477, %v1449
        %vm1481 = vcmask 195584
        %v1482 = vsel %vm1481, %v1479, %v1455
        %v1483 = vsel %vm1481, %v1480, %v1457
        %vm1484 = vcmask 228352
        %v1485 = vsel %vm1484, %v1482, %v1463
        %v1486 = vsel %vm1484, %v1483, %v1465
        %1487 = vst.msk [vmem:[%s259] sm:$0xff] %vm284, %v1485
        %1488 = vst.msk [vmem:[%s259 + $0x8] sm:$0xff] %vm284, %v1486
        %s1489 = sand.u32 %s120, 1
        %s1490 = scalar_lea.sflag [#allocation4], %s1489
        %s1491 = sand.u32 %s120, 1
        %s1492 = smul.addr %s1491, 16
        %s1493 = scalar_lea.vmem [#allocation10], %s1492
        // Predicated region
        $region53: #{tpu_custom_call.1} parent=35 // pred_check
          %p1494 = pneg %p130
        $region54: #{tpu_custom_call.1} parent=35 // pred_check_branch
          %1496 = sbr.rel (%p1494) target = $region56
        $region55: #{tpu_custom_call.1} parent=35 // pred_region
          %s1498 = ssub.s32 256, 256
          %1499 = vsyncadd %s1490, %s1498
          %s1500 = smul.addr %s23, 2
          %s1501 = smul.addr %s1500, 128
          %s1502 = scalar_lea.hbm %s4, %s1501
          %s1503 = sshll.u32 %s1493, 4
          %s1504 = int_to_ptr.vmem [resolvable:$true] %s1503
          %1509 = dma.vmem_to_hbm [thread:$0]  %s1504, 256, %s1502, %s1490, 128, 128, 8
        $region56: #{tpu_custom_call.1} parent=35 // pred_fallthru
          _
      $region36: #{tpu_custom_call.1} parent=5 // pred_fallthru
        _
      %p1510 = scmp.le.s32.totalorder 2, %s18
      // Predicated region
      $region57: #{tpu_custom_call.1} parent=5 // pred_check
        %p1511 = pneg %p1510
      $region58: #{tpu_custom_call.1} parent=5 // pred_check_branch
        %1513 = sbr.rel (%p1511) target = $region60
      $region59: #{tpu_custom_call.1} parent=5 // pred_region
        %s1514 = ssub.s32 %s18, 2
        // Predicated region
        $region61: #{tpu_custom_call.1} parent=59 // pred_check
          %p1515 = pneg %p136
        $region62: #{tpu_custom_call.1} parent=59 // pred_check_branch
          %1517 = sbr.rel (%p1515) target = $region64
        $region63: #{tpu_custom_call.1} parent=59 // pred_region
          %s1518 = sand.u32 %s121, 1
          %s1519 = scalar_lea.sflag [#allocation4], %s1518
          %s1520 = sand.u32 %s121, 1
          %s1521 = smul.addr %s1520, 16
          %s1522 = scalar_lea.vmem [#allocation10], %s1521
          %1523 = dma.done %s1519, 256
        $region64: #{tpu_custom_call.1} parent=59 // pred_fallthru
          _
      $region60: #{tpu_custom_call.1} parent=5 // pred_fallthru
        _
    $region6: #{tpu_custom_call.1} parent=1 // loop_footer
      %s22 = sadd.s32 1, %s18
    $region7: #{tpu_custom_call.1} parent=1 // loop_footer_branch
      %17 = sbr.rel target = $region3
    $region8: #{tpu_custom_call.1} parent=1 // loop_exit
      _
    %1524 = vsyncpa [#allocation3], 1
    %s1525 = scalar_lea.sflag [#allocation3], 1
    %1526 = vsyncpa %s1525, 1
    %1527 = vsyncpa [#allocation6], 1
    %1528 = vsyncpa [#allocation9], 1
    %1529 = vsyncpa [#allocation4], 1
    %s1530 = scalar_lea.sflag [#allocation4], 1
    %1531 = vsyncpa %s1530, 1

</llo_original>
